<compile_context>
chip_gen: v5e
topology: v5e:2x2
jax: 0.10.0
libtpu: 0.0.40
codegen_flags: <defaults>
</compile_context>

<pallas_src>
import functools

import jax
import jax.numpy as jnp
from jax.experimental import pallas as pl
from jax.experimental.pallas import tpu as pltpu

HIDDEN = 512  # matches nn.Linear(..., 512) in the module


def _round_up(n, m):
    return ((n + m - 1) // m) * m


def _soft_q_kernel(x_ref, u_ref,
                   w_x_ref, w_u_ref, b_i_ref,
                   w_f1_ref, b_f1_ref, w_f2_ref, b_f2_ref,
                   w_o1_ref, b_o1_ref, w_o2_ref, b_o2_ref,
                   out_ref):
    # ---- fused first layer (both heads at once): (TB, 2*HIDDEN) -----------
    h = (jnp.dot(x_ref[...], w_x_ref[...], preferred_element_type=jnp.float32)
         + jnp.dot(u_ref[...], w_u_ref[...], preferred_element_type=jnp.float32)
         + b_i_ref[...])
    h = jnp.maximum(h, 0.0)

    h1 = h[:, :HIDDEN].astype(jnp.bfloat16)
    h2 = h[:, HIDDEN:].astype(jnp.bfloat16)

    # ---- per-head 512x512 hidden layer -------------------------------------
    h1 = jnp.dot(h1, w_f1_ref[...], preferred_element_type=jnp.float32) + b_f1_ref[...]
    h1 = jnp.maximum(h1, 0.0)
    h2 = jnp.dot(h2, w_f2_ref[...], preferred_element_type=jnp.float32) + b_f2_ref[...]
    h2 = jnp.maximum(h2, 0.0)

    # ---- N=1 output projections: VPU multiply + lane reduction (no MXU) ----
    v1 = jnp.sum(h1 * w_o1_ref[...].astype(jnp.float32),
                 axis=-1, keepdims=True) + b_o1_ref[...]
    v2 = jnp.sum(h2 * w_o2_ref[...].astype(jnp.float32),
                 axis=-1, keepdims=True) + b_o2_ref[...]

    # single packed store: (TB, 2)
    out_ref[...] = jnp.concatenate([v1, v2], axis=1)


def _const_spec(shape):
    """Whole-array block with a constant index_map (stays resident across the grid)."""
    return pl.BlockSpec(shape, lambda i, _n=len(shape): (0,) * _n)


@jax.jit
def soft_q_forward(x, u, params):
    """x: (B, state_num) f32, u: (B, action_num) f32,
    params: PyTorch-layout dict (weights (in, out), biases (1, out), f32)."""
    B, S = x.shape
    A = u.shape[1]

    # batch tile: fill the MXU M dimension when the batch allows it.
    TB = min(256, _round_up(B, 8))
    B_pad = _round_up(B, TB)
    if B_pad != B:
        x = jnp.pad(x, ((0, B_pad - B), (0, 0)))
        u = jnp.pad(u, ((0, B_pad - B), (0, 0)))

    x = x.astype(jnp.bfloat16)
    u = u.astype(jnp.bfloat16)

    # --- pack / cast the parameters (done on-device under jit; tiny) -------
    # fuse both heads' first layers and split state/action rows of the weight.
    w_i = jnp.concatenate([params["w_i1"], params["w_i2"]], axis=1)   # (S+A, 1024)
    w_x = w_i[:S].astype(jnp.bfloat16)                                # (S, 1024)
    w_u = w_i[S:].astype(jnp.bfloat16)                                # (A, 1024)
    b_i = jnp.concatenate([params["b_i1"], params["b_i2"]], axis=1)   # (1, 1024) f32

    w_f1 = params["w_f1"].astype(jnp.bfloat16)                        # (512, 512)
    w_f2 = params["w_f2"].astype(jnp.bfloat16)
    b_f1 = params["b_f1"]                                             # (1, 512) f32
    b_f2 = params["b_f2"]

    w_o1 = params["w_o1"].reshape(1, HIDDEN).astype(jnp.bfloat16)     # (1, 512)
    w_o2 = params["w_o2"].reshape(1, HIDDEN).astype(jnp.bfloat16)
    b_o1 = params["b_o1"]                                             # (1, 1) f32
    b_o2 = params["b_o2"]

    weights = (w_x, w_u, b_i, w_f1, b_f1, w_f2, b_f2, w_o1, b_o1, w_o2, b_o2)

    in_specs = ([pl.BlockSpec((TB, S), lambda i: (i, 0)),
                 pl.BlockSpec((TB, A), lambda i: (i, 0))]
                + [_const_spec(w.shape) for w in weights])
    out_spec = pl.BlockSpec((TB, 2), lambda i: (i, 0))

    out = pl.pallas_call(
        _soft_q_kernel,
        out_shape=jax.ShapeDtypeStruct((B_pad, 2), jnp.float32),
        grid=(pl.cdiv(B_pad, TB),),
        in_specs=in_specs,
        out_specs=out_spec,
        compiler_params=pltpu.CompilerParams(
            dimension_semantics=("parallel",),
            vmem_limit_bytes=16 << 20),
    )(x, u, *weights)

    return out[:B, 0:1], out[:B, 1:2]


def init_params(key, state_num, action_num):
    """Deterministic init mimicking PyTorch nn.Linear default (U(-k, k), k=1/sqrt(fan_in)).
    Weights are stored as (in_features, out_features), biases as (1, out)."""
    in_dim = state_num + action_num

    def linear(key, fan_in, fan_out):
        kw, kb = jax.random.split(key)
        k = 1.0 / jnp.sqrt(jnp.float32(fan_in))
        w = jax.random.uniform(kw, (fan_in, fan_out), jnp.float32, -k, k)
        b = jax.random.uniform(kb, (1, fan_out), jnp.float32, -k, k)
        return w, b

    keys = jax.random.split(key, 6)
    w_i1, b_i1 = linear(keys[0], in_dim, HIDDEN)
    w_f1, b_f1 = linear(keys[1], HIDDEN, HIDDEN)
    w_o1, b_o1 = linear(keys[2], HIDDEN, 1)
    w_i2, b_i2 = linear(keys[3], in_dim, HIDDEN)
    w_f2, b_f2 = linear(keys[4], HIDDEN, HIDDEN)
    w_o2, b_o2 = linear(keys[5], HIDDEN, 1)
    return dict(w_i1=w_i1, b_i1=b_i1, w_f1=w_f1, b_f1=b_f1, w_o1=w_o1, b_o1=b_o1,
                w_i2=w_i2, b_i2=b_i2, w_f2=w_f2, b_f2=b_f2, w_o2=w_o2, b_o2=b_o2)


def reference_forward_f32(x, u, p):
    """Pure-f32 JAX reference (PyTorch semantics)."""
    xu = jnp.concatenate([x, u], axis=1)
    h1 = jax.nn.relu(xu @ p["w_i1"] + p["b_i1"])
    h1 = jax.nn.relu(h1 @ p["w_f1"] + p["b_f1"])
    v1 = h1 @ p["w_o1"] + p["b_o1"]
    h2 = jax.nn.relu(xu @ p["w_i2"] + p["b_i2"])
    h2 = jax.nn.relu(h2 @ p["w_f2"] + p["b_f2"])
    v2 = h2 @ p["w_o2"] + p["b_o2"]
    return v1, v2


def reference_forward_mirror(x, u, p):
    """Pure-JAX reference that mirrors the kernel's bf16 weight / f32 accumulate math."""
    S = x.shape[1]
    xb = x.astype(jnp.bfloat16)
    ub = u.astype(jnp.bfloat16)

    def head(w_i, b_i, w_f, b_f, w_o, b_o):
        w_i = w_i.astype(jnp.bfloat16)
        h = (jnp.dot(xb, w_i[:S], preferred_element_type=jnp.float32)
             + jnp.dot(ub, w_i[S:], preferred_element_type=jnp.float32) + b_i)
        h = jnp.maximum(h, 0.0).astype(jnp.bfloat16)
        h = jnp.dot(h, w_f.astype(jnp.bfloat16),
                    preferred_element_type=jnp.float32) + b_f
        h = jnp.maximum(h, 0.0)
        w_o_row = w_o.reshape(1, -1).astype(jnp.bfloat16).astype(jnp.float32)
        return jnp.sum(h * w_o_row, axis=-1, keepdims=True) + b_o

    v1 = head(p["w_i1"], p["b_i1"], p["w_f1"], p["b_f1"], p["w_o1"], p["b_o1"])
    v2 = head(p["w_i2"], p["b_i2"], p["w_f2"], p["b_f2"], p["w_o2"], p["b_o2"])
    return v1, v2


if __name__ == "__main__":
    key = jax.random.PRNGKey(0)
    k_params, k_x, k_u = jax.random.split(key, 3)

    batch, state_num, action_num = 4, 8, 4
    params = init_params(k_params, state_num, action_num)
    x = jax.random.normal(k_x, (batch, state_num), jnp.float32)
    u = jax.random.normal(k_u, (batch, action_num), jnp.float32)

    v1, v2 = soft_q_forward(x, u, params)
    jax.block_until_ready((v1, v2))
    assert v1.shape == (batch, 1) and v2.shape == (batch, 1)

    # Tight check against a reference that mirrors the kernel's bf16/f32 math.
    m1, m2 = reference_forward_mirror(x, u, params)
    assert jnp.allclose(v1, m1, atol=1e-2, rtol=1e-2)
    assert jnp.allclose(v2, m2, atol=1e-2, rtol=1e-2)

    # Loose check against the full-f32 PyTorch-equivalent reference (bf16 weights).
    r1, r2 = reference_forward_f32(x, u, params)
    assert jnp.allclose(v1, r1, atol=1e-1, rtol=1e-1)
    assert jnp.allclose(v2, r2, atol=1e-1, rtol=1e-1)

    print("KERNEL_OK")
</pallas_src>

<mosaic_0001>
module attributes {stable_mosaic.version = 11 : i64} {
  func.func @_soft_q_kernel(%arg0: i32, %arg1: memref<8x8xbf16, #tpu.memory_space<vmem>>, %arg2: memref<8x4xbf16, #tpu.memory_space<vmem>>, %arg3: memref<8x1024xbf16, #tpu.memory_space<vmem>>, %arg4: memref<4x1024xbf16, #tpu.memory_space<vmem>>, %arg5: memref<1x1024xf32, #tpu.memory_space<vmem>>, %arg6: memref<512x512xbf16, #tpu.memory_space<vmem>>, %arg7: memref<1x512xf32, #tpu.memory_space<vmem>>, %arg8: memref<512x512xbf16, #tpu.memory_space<vmem>>, %arg9: memref<1x512xf32, #tpu.memory_space<vmem>>, %arg10: memref<1x512xbf16, #tpu.memory_space<vmem>>, %arg11: memref<1x1xf32, #tpu.memory_space<vmem>>, %arg12: memref<1x512xbf16, #tpu.memory_space<vmem>>, %arg13: memref<1x1xf32, #tpu.memory_space<vmem>>, %arg14: memref<8x2xf32, #tpu.memory_space<vmem>>) attributes {dimension_semantics = [#tpu.dimension_semantics<parallel>], iteration_bounds = array<i64: 1>, scalar_prefetch = 0 : i64, scratch_operands = 0 : i64, tpu.core_type = #tpu.core_type<tc>, window_params = [{transform_indices = @transform_0, window_bounds = array<i64: 8, 8>}, {transform_indices = @transform_1, window_bounds = array<i64: 8, 4>}, {pipeline_mode = #tpu.pipeline_mode<synchronous>, transform_indices = @transform_2, window_bounds = array<i64: 8, 1024>}, {pipeline_mode = #tpu.pipeline_mode<synchronous>, transform_indices = @transform_3, window_bounds = array<i64: 4, 1024>}, {pipeline_mode = #tpu.pipeline_mode<synchronous>, transform_indices = @transform_4, window_bounds = array<i64: 1, 1024>}, {pipeline_mode = #tpu.pipeline_mode<synchronous>, transform_indices = @transform_5, window_bounds = array<i64: 512, 512>}, {pipeline_mode = #tpu.pipeline_mode<synchronous>, transform_indices = @transform_6, window_bounds = array<i64: 1, 512>}, {pipeline_mode = #tpu.pipeline_mode<synchronous>, transform_indices = @transform_7, window_bounds = array<i64: 512, 512>}, {pipeline_mode = #tpu.pipeline_mode<synchronous>, transform_indices = @transform_8, window_bounds = array<i64: 1, 512>}, {pipeline_mode = #tpu.pipeline_mode<synchronous>, transform_indices = @transform_9, window_bounds = array<i64: 1, 512>}, {pipeline_mode = #tpu.pipeline_mode<synchronous>, transform_indices = @transform_10, window_bounds = array<i64: 1, 1>}, {pipeline_mode = #tpu.pipeline_mode<synchronous>, transform_indices = @transform_11, window_bounds = array<i64: 1, 512>}, {pipeline_mode = #tpu.pipeline_mode<synchronous>, transform_indices = @transform_12, window_bounds = array<i64: 1, 1>}, {transform_indices = @transform_13, window_bounds = array<i64: 8, 2>}]} {
    %c0 = arith.constant 0 : index
    %c0_0 = arith.constant 0 : index
    %0 = vector.load %arg1[%c0, %c0_0] : memref<8x8xbf16, #tpu.memory_space<vmem>>, vector<8x8xbf16>
    %c0_1 = arith.constant 0 : index
    %c0_2 = arith.constant 0 : index
    %1 = vector.load %arg3[%c0_1, %c0_2] : memref<8x1024xbf16, #tpu.memory_space<vmem>>, vector<8x1024xbf16>
    %cst = arith.constant dense<0.000000e+00> : vector<8x1024xf32>
    %2 = tpu.matmul %0, %1, %cst {dimension_numbers = #tpu.dot_dimension_numbers<[1], [0], [0], [1], [0, 0, 1, 1], [], []>} : vector<8x8xbf16>, vector<8x1024xbf16>, vector<8x1024xf32> -> vector<8x1024xf32>
    %c0_3 = arith.constant 0 : index
    %c0_4 = arith.constant 0 : index
    %3 = vector.load %arg2[%c0_3, %c0_4] : memref<8x4xbf16, #tpu.memory_space<vmem>>, vector<8x4xbf16>
    %c0_5 = arith.constant 0 : index
    %c0_6 = arith.constant 0 : index
    %4 = vector.load %arg4[%c0_5, %c0_6] : memref<4x1024xbf16, #tpu.memory_space<vmem>>, vector<4x1024xbf16>
    %cst_7 = arith.constant dense<0.000000e+00> : vector<8x1024xf32>
    %5 = tpu.matmul %3, %4, %cst_7 {dimension_numbers = #tpu.dot_dimension_numbers<[1], [0], [0], [1], [0, 0, 1, 1], [], []>} : vector<8x4xbf16>, vector<4x1024xbf16>, vector<8x1024xf32> -> vector<8x1024xf32>
    %6 = arith.addf %2, %5 : vector<8x1024xf32>
    %c0_8 = arith.constant 0 : index
    %c0_9 = arith.constant 0 : index
    %7 = vector.load %arg5[%c0_8, %c0_9] : memref<1x1024xf32, #tpu.memory_space<vmem>>, vector<1x1024xf32>
    %8 = vector.broadcast %7 : vector<1x1024xf32> to vector<8x1024xf32>
    %9 = arith.addf %6, %8 : vector<8x1024xf32>
    %cst_10 = arith.constant 0.000000e+00 : f32
    %10 = vector.broadcast %cst_10 : f32 to vector<8x1024xf32>
    %11 = arith.maximumf %9, %10 : vector<8x1024xf32>
    %12 = vector.extract_strided_slice %11 {offsets = [0, 0], sizes = [8, 512], strides = [1, 1]} : vector<8x1024xf32> to vector<8x512xf32>
    %13 = arith.truncf %12 : vector<8x512xf32> to vector<8x512xbf16>
    %14 = vector.extract_strided_slice %11 {offsets = [0, 512], sizes = [8, 512], strides = [1, 1]} : vector<8x1024xf32> to vector<8x512xf32>
    %15 = arith.truncf %14 : vector<8x512xf32> to vector<8x512xbf16>
    %c0_11 = arith.constant 0 : index
    %c0_12 = arith.constant 0 : index
    %16 = vector.load %arg6[%c0_11, %c0_12] : memref<512x512xbf16, #tpu.memory_space<vmem>>, vector<512x512xbf16>
    %cst_13 = arith.constant dense<0.000000e+00> : vector<8x512xf32>
    %17 = tpu.matmul %13, %16, %cst_13 {dimension_numbers = #tpu.dot_dimension_numbers<[1], [0], [0], [1], [0, 0, 1, 1], [], []>} : vector<8x512xbf16>, vector<512x512xbf16>, vector<8x512xf32> -> vector<8x512xf32>
    %c0_14 = arith.constant 0 : index
    %c0_15 = arith.constant 0 : index
    %18 = vector.load %arg7[%c0_14, %c0_15] : memref<1x512xf32, #tpu.memory_space<vmem>>, vector<1x512xf32>
    %19 = vector.broadcast %18 : vector<1x512xf32> to vector<8x512xf32>
    %20 = arith.addf %17, %19 : vector<8x512xf32>
    %cst_16 = arith.constant 0.000000e+00 : f32
    %21 = vector.broadcast %cst_16 : f32 to vector<8x512xf32>
    %22 = arith.maximumf %20, %21 : vector<8x512xf32>
    %c0_17 = arith.constant 0 : index
    %c0_18 = arith.constant 0 : index
    %23 = vector.load %arg8[%c0_17, %c0_18] : memref<512x512xbf16, #tpu.memory_space<vmem>>, vector<512x512xbf16>
    %cst_19 = arith.constant dense<0.000000e+00> : vector<8x512xf32>
    %24 = tpu.matmul %15, %23, %cst_19 {dimension_numbers = #tpu.dot_dimension_numbers<[1], [0], [0], [1], [0, 0, 1, 1], [], []>} : vector<8x512xbf16>, vector<512x512xbf16>, vector<8x512xf32> -> vector<8x512xf32>
    %c0_20 = arith.constant 0 : index
    %c0_21 = arith.constant 0 : index
    %25 = vector.load %arg9[%c0_20, %c0_21] : memref<1x512xf32, #tpu.memory_space<vmem>>, vector<1x512xf32>
    %26 = vector.broadcast %25 : vector<1x512xf32> to vector<8x512xf32>
    %27 = arith.addf %24, %26 : vector<8x512xf32>
    %cst_22 = arith.constant 0.000000e+00 : f32
    %28 = vector.broadcast %cst_22 : f32 to vector<8x512xf32>
    %29 = arith.maximumf %27, %28 : vector<8x512xf32>
    %c0_23 = arith.constant 0 : index
    %c0_24 = arith.constant 0 : index
    %30 = vector.load %arg10[%c0_23, %c0_24] : memref<1x512xbf16, #tpu.memory_space<vmem>>, vector<1x512xbf16>
    %31 = arith.extf %30 : vector<1x512xbf16> to vector<1x512xf32>
    %32 = vector.broadcast %31 : vector<1x512xf32> to vector<8x512xf32>
    %33 = arith.mulf %22, %32 : vector<8x512xf32>
    %cst_25 = arith.constant dense<0.000000e+00> : vector<8xf32>
    %34 = vector.multi_reduction <add>, %33, %cst_25 [1] : vector<8x512xf32> to vector<8xf32>
    %35 = vector.shape_cast %34 : vector<8xf32> to vector<8x1xf32>
    %c0_26 = arith.constant 0 : index
    %c0_27 = arith.constant 0 : index
    %36 = vector.load %arg11[%c0_26, %c0_27] : memref<1x1xf32, #tpu.memory_space<vmem>>, vector<1x1xf32>
    %37 = vector.broadcast %36 : vector<1x1xf32> to vector<8x1xf32>
    %38 = arith.addf %35, %37 : vector<8x1xf32>
    %c0_28 = arith.constant 0 : index
    %c0_29 = arith.constant 0 : index
    %39 = vector.load %arg12[%c0_28, %c0_29] : memref<1x512xbf16, #tpu.memory_space<vmem>>, vector<1x512xbf16>
    %40 = arith.extf %39 : vector<1x512xbf16> to vector<1x512xf32>
    %41 = vector.broadcast %40 : vector<1x512xf32> to vector<8x512xf32>
    %42 = arith.mulf %29, %41 : vector<8x512xf32>
    %cst_30 = arith.constant dense<0.000000e+00> : vector<8xf32>
    %43 = vector.multi_reduction <add>, %42, %cst_30 [1] : vector<8x512xf32> to vector<8xf32>
    %44 = vector.shape_cast %43 : vector<8xf32> to vector<8x1xf32>
    %c0_31 = arith.constant 0 : index
    %c0_32 = arith.constant 0 : index
    %45 = vector.load %arg13[%c0_31, %c0_32] : memref<1x1xf32, #tpu.memory_space<vmem>>, vector<1x1xf32>
    %46 = vector.broadcast %45 : vector<1x1xf32> to vector<8x1xf32>
    %47 = arith.addf %44, %46 : vector<8x1xf32>
    %48 = tpu.concatenate %38, %47 in 1 : vector<8x1xf32>, vector<8x1xf32> -> vector<8x2xf32>
    %c0_33 = arith.constant 0 : index
    %c0_34 = arith.constant 0 : index
    %49 = vector.load %arg14[%c0_33, %c0_34] : memref<8x2xf32, #tpu.memory_space<vmem>>, vector<8x2xf32>
    tpu.vector_store %arg14[%c0_33, %c0_34], %48 {strides = array<i32>} : memref<8x2xf32, #tpu.memory_space<vmem>>, vector<8x2xf32>,
    return
  }
  func.func @transform_0(%arg0: i32) -> (i32, i32) {
    %c0_i32 = arith.constant 0 : i32
    %c0_i32_0 = arith.constant 0 : i32
    return %arg0, %c0_i32 : i32, i32
  }
  func.func @transform_1(%arg0: i32) -> (i32, i32) {
    %c0_i32 = arith.constant 0 : i32
    %c0_i32_0 = arith.constant 0 : i32
    return %arg0, %c0_i32 : i32, i32
  }
  func.func @transform_2(%arg0: i32) -> (i32, i32) {
    %c0_i32 = arith.constant 0 : i32
    %c0_i32_0 = arith.constant 0 : i32
    %c0_i32_1 = arith.constant 0 : i32
    return %c0_i32, %c0_i32_0 : i32, i32
  }
  func.func @transform_3(%arg0: i32) -> (i32, i32) {
    %c0_i32 = arith.constant 0 : i32
    %c0_i32_0 = arith.constant 0 : i32
    %c0_i32_1 = arith.constant 0 : i32
    return %c0_i32, %c0_i32_0 : i32, i32
  }
  func.func @transform_4(%arg0: i32) -> (i32, i32) {
    %c0_i32 = arith.constant 0 : i32
    %c0_i32_0 = arith.constant 0 : i32
    %c0_i32_1 = arith.constant 0 : i32
    return %c0_i32, %c0_i32_0 : i32, i32
  }
  func.func @transform_5(%arg0: i32) -> (i32, i32) {
    %c0_i32 = arith.constant 0 : i32
    %c0_i32_0 = arith.constant 0 : i32
    %c0_i32_1 = arith.constant 0 : i32
    return %c0_i32, %c0_i32_0 : i32, i32
  }
  func.func @transform_6(%arg0: i32) -> (i32, i32) {
    %c0_i32 = arith.constant 0 : i32
    %c0_i32_0 = arith.constant 0 : i32
    %c0_i32_1 = arith.constant 0 : i32
    return %c0_i32, %c0_i32_0 : i32, i32
  }
  func.func @transform_7(%arg0: i32) -> (i32, i32) {
    %c0_i32 = arith.constant 0 : i32
    %c0_i32_0 = arith.constant 0 : i32
    %c0_i32_1 = arith.constant 0 : i32
    return %c0_i32, %c0_i32_0 : i32, i32
  }
  func.func @transform_8(%arg0: i32) -> (i32, i32) {
    %c0_i32 = arith.constant 0 : i32
    %c0_i32_0 = arith.constant 0 : i32
    %c0_i32_1 = arith.constant 0 : i32
    return %c0_i32, %c0_i32_0 : i32, i32
  }
  func.func @transform_9(%arg0: i32) -> (i32, i32) {
    %c0_i32 = arith.constant 0 : i32
    %c0_i32_0 = arith.constant 0 : i32
    %c0_i32_1 = arith.constant 0 : i32
    return %c0_i32, %c0_i32_0 : i32, i32
  }
  func.func @transform_10(%arg0: i32) -> (i32, i32) {
    %c0_i32 = arith.constant 0 : i32
    %c0_i32_0 = arith.constant 0 : i32
    %c0_i32_1 = arith.constant 0 : i32
    return %c0_i32, %c0_i32_0 : i32, i32
  }
  func.func @transform_11(%arg0: i32) -> (i32, i32) {
    %c0_i32 = arith.constant 0 : i32
    %c0_i32_0 = arith.constant 0 : i32
    %c0_i32_1 = arith.constant 0 : i32
    return %c0_i32, %c0_i32_0 : i32, i32
  }
  func.func @transform_12(%arg0: i32) -> (i32, i32) {
    %c0_i32 = arith.constant 0 : i32
    %c0_i32_0 = arith.constant 0 : i32
    %c0_i32_1 = arith.constant 0 : i32
    return %c0_i32, %c0_i32_0 : i32, i32
  }
  func.func @transform_13(%arg0: i32) -> (i32, i32) {
    %c0_i32 = arith.constant 0 : i32
    %c0_i32_0 = arith.constant 0 : i32
    return %arg0, %c0_i32 : i32, i32
  }
}

</mosaic_0001>

<llo_original>
// kernel: soft_q_forward.1
$region0: #{soft_q_forward.1}
  #allocation0 [shape = 'u32[]', space=smem, size = 0x4, offset = 0x4, fixed_abs, tag = 'smem constant byte address 0x4 - core index']
  #allocation1 [shape = 'u32[72,128]{1,0:T(1,128)}', space=vmem, size = 0x9000, scoped, tag = 'internal scratch']
  #allocation2 [shape = 'f32[1,1]{1,0:T(1,128)S(1)}', space=vmem, size = 0x200, scoped, tag = 'scoped memory for soft_q_forward.1']
  #allocation3 [shape = 'f32[1,1]{1,0:T(1,128)S(1)}', space=vmem, size = 0x200, scoped, tag = 'scoped memory for soft_q_forward.1']
  %s0 = inlined_call_operand.vmem [shape: bf16[8,8], index: 0, kind: input, shape index: {}]
  %s1 = inlined_call_operand.vmem [shape: bf16[8,4], index: 1, kind: input, shape index: {}]
  %s2 = inlined_call_operand.vmem [shape: bf16[8,1024], index: 2, kind: input, shape index: {}]
  %s3 = inlined_call_operand.vmem [shape: bf16[4,1024], index: 3, kind: input, shape index: {}]
  %s4 = inlined_call_operand.vmem [shape: f32[1,1024], index: 4, kind: input, shape index: {}]
  %s5 = inlined_call_operand.vmem [shape: bf16[512,512], index: 5, kind: input, shape index: {}]
  %s6 = inlined_call_operand.vmem [shape: f32[1,512], index: 6, kind: input, shape index: {}]
  %s7 = inlined_call_operand.vmem [shape: bf16[512,512], index: 7, kind: input, shape index: {}]
  %s8 = inlined_call_operand.vmem [shape: f32[1,512], index: 8, kind: input, shape index: {}]
  %s9 = inlined_call_operand.vmem [shape: bf16[1,512], index: 9, kind: input, shape index: {}]
  %s10 = inlined_call_operand.<no memory space> [shape: f32[1,1], index: 10, kind: input, shape index: {}]
  %s11 = inlined_call_operand.vmem [shape: bf16[1,512], index: 11, kind: input, shape index: {}]
  %s12 = inlined_call_operand.<no memory space> [shape: f32[1,1], index: 12, kind: input, shape index: {}]
  %s13 = inlined_call_operand.vmem [shape: f32[8,2], index: 13, kind: output, shape index: {}]
  %s14 = sld [smem:[#allocation0]]
  $region62: #{soft_q_forward.1} parent=0
    _
  %s16 = ssub.s32 1, %s14
  %s17 = scalar_select 0, %s16, %s14
  %v18 = vstv %s10
  %19 = vst [vmem:[#allocation2] sm:$0x1] %v18
  %v20 = vstv %s12
  %21 = vst [vmem:[#allocation3] sm:$0x1] %v20
  // Predicated region
  $region2: #{soft_q_forward.1} parent=0 // pred_check
    _
  $region3: #{soft_q_forward.1} parent=0 // pred_check_branch
    %23 = sbr.rel (0) target = $region5
  $region4: #{soft_q_forward.1} parent=0 // pred_region
    _
  $region5: #{soft_q_forward.1} parent=0 // pred_fallthru
    _
  // Predicated region
  $region6: #{soft_q_forward.1} parent=0 // pred_check
    _
  $region7: #{soft_q_forward.1} parent=0 // pred_check_branch
    %25 = sbr.rel (0) target = $region9
  $region8: #{soft_q_forward.1} parent=0 // pred_region
    _
  $region9: #{soft_q_forward.1} parent=0 // pred_fallthru
    _
  // Predicated region
  $region10: #{soft_q_forward.1} parent=0 // pred_check
    _
  $region11: #{soft_q_forward.1} parent=0 // pred_check_branch
    %27 = sbr.rel (0) target = $region13
  $region12: #{soft_q_forward.1} parent=0 // pred_region
    _
  $region13: #{soft_q_forward.1} parent=0 // pred_fallthru
    _
  // Predicated region
  $region14: #{soft_q_forward.1} parent=0 // pred_check
    _
  $region15: #{soft_q_forward.1} parent=0 // pred_check_branch
    %29 = sbr.rel (0) target = $region17
  $region16: #{soft_q_forward.1} parent=0 // pred_region
    _
  $region17: #{soft_q_forward.1} parent=0 // pred_fallthru
    _
  // Predicated region
  $region18: #{soft_q_forward.1} parent=0 // pred_check
    _
  $region19: #{soft_q_forward.1} parent=0 // pred_check_branch
    %31 = sbr.rel (0) target = $region21
  $region20: #{soft_q_forward.1} parent=0 // pred_region
    _
  $region21: #{soft_q_forward.1} parent=0 // pred_fallthru
    _
  // Predicated region
  $region22: #{soft_q_forward.1} parent=0 // pred_check
    _
  $region23: #{soft_q_forward.1} parent=0 // pred_check_branch
    %33 = sbr.rel (0) target = $region25
  $region24: #{soft_q_forward.1} parent=0 // pred_region
    _
  $region25: #{soft_q_forward.1} parent=0 // pred_fallthru
    _
  // Predicated region
  $region26: #{soft_q_forward.1} parent=0 // pred_check
    _
  $region27: #{soft_q_forward.1} parent=0 // pred_check_branch
    %35 = sbr.rel (0) target = $region29
  $region28: #{soft_q_forward.1} parent=0 // pred_region
    _
  $region29: #{soft_q_forward.1} parent=0 // pred_fallthru
    _
  // Predicated region
  $region30: #{soft_q_forward.1} parent=0 // pred_check
    _
  $region31: #{soft_q_forward.1} parent=0 // pred_check_branch
    %37 = sbr.rel (0) target = $region33
  $region32: #{soft_q_forward.1} parent=0 // pred_region
    _
  $region33: #{soft_q_forward.1} parent=0 // pred_fallthru
    _
  // Predicated region
  $region34: #{soft_q_forward.1} parent=0 // pred_check
    _
  $region35: #{soft_q_forward.1} parent=0 // pred_check_branch
    %39 = sbr.rel (0) target = $region37
  $region36: #{soft_q_forward.1} parent=0 // pred_region
    _
  $region37: #{soft_q_forward.1} parent=0 // pred_fallthru
    _
  // Predicated region
  $region38: #{soft_q_forward.1} parent=0 // pred_check
    _
  $region39: #{soft_q_forward.1} parent=0 // pred_check_branch
    %41 = sbr.rel (0) target = $region41
  $region40: #{soft_q_forward.1} parent=0 // pred_region
    _
  $region41: #{soft_q_forward.1} parent=0 // pred_fallthru
    _
  // Predicated region
  $region42: #{soft_q_forward.1} parent=0 // pred_check
    _
  $region43: #{soft_q_forward.1} parent=0 // pred_check_branch
    %43 = sbr.rel (0) target = $region45
  $region44: #{soft_q_forward.1} parent=0 // pred_region
    _
  $region45: #{soft_q_forward.1} parent=0 // pred_fallthru
    _
  // Predicated region
  $region46: #{soft_q_forward.1} parent=0 // pred_check
    _
  $region47: #{soft_q_forward.1} parent=0 // pred_check_branch
    %45 = sbr.rel (0) target = $region49
  $region48: #{soft_q_forward.1} parent=0 // pred_region
    _
  $region49: #{soft_q_forward.1} parent=0 // pred_fallthru
    _
  // Predicated region
  $region50: #{soft_q_forward.1} parent=0 // pred_check
    _
  $region51: #{soft_q_forward.1} parent=0 // pred_check_branch
    %47 = sbr.rel (0) target = $region53
  $region52: #{soft_q_forward.1} parent=0 // pred_region
    _
  $region53: #{soft_q_forward.1} parent=0 // pred_fallthru
    _
  %v49 = vld [vmem:[%s0] sm:$0xf]
  %v50 = vld [vmem:[%s2] sm:$0xff]
  %v51 = vld [vmem:[%s2 + $0x8] sm:$0xff]
  %v52 = vld [vmem:[%s2 + $0x10] sm:$0xff]
  %v53 = vld [vmem:[%s2 + $0x18] sm:$0xff]
  %v54 = vld [vmem:[%s1] sm:$0xf]
  %v55 = vld [vmem:[%s3] sm:$0xff]
  %v56 = vld [vmem:[%s3 + $0x8] sm:$0xff]
  %58 = vst [vmem:[#allocation1] ss:$4 sm:$0xff] %v55
  %s60 = scalar_lea.vmem [#allocation1], 32
  %61 = vst [vmem:[%s60] ss:$4 sm:$0xff] %v56
  %v62 = vld.sshfl [vmem:[#allocation1] sm:$0xff pattern:$0x73625140]
  %v63 = vld.sshfl [vmem:[#allocation1 + $0x8] sm:$0xff pattern:$0x73625140]
  %v64 = vld.sshfl [vmem:[#allocation1 + $0x10] sm:$0xff pattern:$0x73625140]
  %v65 = vld.sshfl [vmem:[#allocation1 + $0x18] sm:$0xff pattern:$0x73625140]
  %v66 = vld.sshfl [vmem:[#allocation1 + $0x20] sm:$0xff pattern:$0x73625140]
  %v67 = vld.sshfl [vmem:[#allocation1 + $0x28] sm:$0xff pattern:$0x73625140]
  %v68 = vld.sshfl [vmem:[#allocation1 + $0x30] sm:$0xff pattern:$0x73625140]
  %v69 = vld.sshfl [vmem:[#allocation1 + $0x38] sm:$0xff pattern:$0x73625140]
  %vm70 = vcmask 31744
  %v72 = vsel %vm70, %v54, 0
  %vm74 = vcmask 1041408
  %v75 = vsel %vm74, %v62, 0
  %v77 = vsel %vm74, %v63, 0
  %v79 = vsel %vm74, %v64, 0
  %v81 = vsel %vm74, %v65, 0
  %v83 = vsel %vm74, %v66, 0
  %v85 = vsel %vm74, %v67, 0
  %v87 = vsel %vm74, %v68, 0
  %v89 = vsel %vm74, %v69, 0
  %91 = vmatpush.bf16.msra.mxu0 0
  %92 = vmatpush.bf16.msra.mxu0 0
  %93 = vmatpush.bf16.msra.mxu0 0
  %94 = vmatpush.bf16.msra.mxu0 0
  %95 = vmatpush.bf16.msra.mxu0 0
  %96 = vmatpush.bf16.msra.mxu0 0
  %97 = vmatpush.bf16.msra.mxu0 0
  %98 = vmatpush.bf16.msra.mxu0 %v75
  %99 = vmatmul.bf16.gmra.mxu0 %v72
  %v100 = vpop.f32.mrf.mxu0
  %v101 = vadd.f32 0.0, %v100
  %v102 = vpop.f32.mrf.mxu0
  %103 = vdwg.mxu0
  %104 = vmatpush.bf16.msra.mxu0 0
  %105 = vmatpush.bf16.msra.mxu0 0
  %106 = vmatpush.bf16.msra.mxu0 0
  %107 = vmatpush.bf16.msra.mxu0 0
  %108 = vmatpush.bf16.msra.mxu0 0
  %109 = vmatpush.bf16.msra.mxu0 0
  %110 = vmatpush.bf16.msra.mxu0 0
  %111 = vmatpush.bf16.msra.mxu0 %v77
  %112 = vmatmul.bf16.gmra.mxu0 %v72
  %v113 = vpop.f32.mrf.mxu0
  %v114 = vadd.f32 0.0, %v113
  %v115 = vpop.f32.mrf.mxu0
  %116 = vdwg.mxu0
  %117 = vmatpush.bf16.msra.mxu0 0
  %118 = vmatpush.bf16.msra.mxu0 0
  %119 = vmatpush.bf16.msra.mxu0 0
  %120 = vmatpush.bf16.msra.mxu0 0
  %121 = vmatpush.bf16.msra.mxu0 0
  %122 = vmatpush.bf16.msra.mxu0 0
  %123 = vmatpush.bf16.msra.mxu0 0
  %124 = vmatpush.bf16.msra.mxu0 %v79
  %125 = vmatmul.bf16.gmra.mxu0 %v72
  %v126 = vpop.f32.mrf.mxu0
  %v127 = vadd.f32 0.0, %v126
  %v128 = vpop.f32.mrf.mxu0
  %129 = vdwg.mxu0
  %130 = vmatpush.bf16.msra.mxu0 0
  %131 = vmatpush.bf16.msra.mxu0 0
  %132 = vmatpush.bf16.msra.mxu0 0
  %133 = vmatpush.bf16.msra.mxu0 0
  %134 = vmatpush.bf16.msra.mxu0 0
  %135 = vmatpush.bf16.msra.mxu0 0
  %136 = vmatpush.bf16.msra.mxu0 0
  %137 = vmatpush.bf16.msra.mxu0 %v81
  %138 = vmatmul.bf16.gmra.mxu0 %v72
  %v139 = vpop.f32.mrf.mxu0
  %v140 = vadd.f32 0.0, %v139
  %v141 = vpop.f32.mrf.mxu0
  %142 = vdwg.mxu0
  %143 = vmatpush.bf16.msra.mxu0 0
  %144 = vmatpush.bf16.msra.mxu0 0
  %145 = vmatpush.bf16.msra.mxu0 0
  %146 = vmatpush.bf16.msra.mxu0 0
  %147 = vmatpush.bf16.msra.mxu0 0
  %148 = vmatpush.bf16.msra.mxu0 0
  %149 = vmatpush.bf16.msra.mxu0 0
  %150 = vmatpush.bf16.msra.mxu0 %v83
  %151 = vmatmul.bf16.gmra.mxu0 %v72
  %v152 = vpop.f32.mrf.mxu0
  %v153 = vadd.f32 0.0, %v152
  %v154 = vpop.f32.mrf.mxu0
  %155 = vdwg.mxu0
  %156 = vmatpush.bf16.msra.mxu0 0
  %157 = vmatpush.bf16.msra.mxu0 0
  %158 = vmatpush.bf16.msra.mxu0 0
  %159 = vmatpush.bf16.msra.mxu0 0
  %160 = vmatpush.bf16.msra.mxu0 0
  %161 = vmatpush.bf16.msra.mxu0 0
  %162 = vmatpush.bf16.msra.mxu0 0
  %163 = vmatpush.bf16.msra.mxu0 %v85
  %164 = vmatmul.bf16.gmra.mxu0 %v72
  %v165 = vpop.f32.mrf.mxu0
  %v166 = vadd.f32 0.0, %v165
  %v167 = vpop.f32.mrf.mxu0
  %168 = vdwg.mxu0
  %169 = vmatpush.bf16.msra.mxu0 0
  %170 = vmatpush.bf16.msra.mxu0 0
  %171 = vmatpush.bf16.msra.mxu0 0
  %172 = vmatpush.bf16.msra.mxu0 0
  %173 = vmatpush.bf16.msra.mxu0 0
  %174 = vmatpush.bf16.msra.mxu0 0
  %175 = vmatpush.bf16.msra.mxu0 0
  %176 = vmatpush.bf16.msra.mxu0 %v87
  %177 = vmatmul.bf16.gmra.mxu0 %v72
  %v178 = vpop.f32.mrf.mxu0
  %v179 = vadd.f32 0.0, %v178
  %v180 = vpop.f32.mrf.mxu0
  %181 = vdwg.mxu0
  %182 = vmatpush.bf16.msra.mxu0 0
  %183 = vmatpush.bf16.msra.mxu0 0
  %184 = vmatpush.bf16.msra.mxu0 0
  %185 = vmatpush.bf16.msra.mxu0 0
  %186 = vmatpush.bf16.msra.mxu0 0
  %187 = vmatpush.bf16.msra.mxu0 0
  %188 = vmatpush.bf16.msra.mxu0 0
  %189 = vmatpush.bf16.msra.mxu0 %v89
  %190 = vmatmul.bf16.gmra.mxu0 %v72
  %v191 = vpop.f32.mrf.mxu0
  %v192 = vadd.f32 0.0, %v191
  %v193 = vpop.f32.mrf.mxu0
  %194 = vdwg.mxu0
  %v199 = vunpack.c.l.b16 %v50
  %v200 = vunpack.c.h.b16 %v50
  %v201 = vunpack.c.l.b16 %v51
  %v202 = vunpack.c.h.b16 %v51
  %v203 = vunpack.c.l.b16 %v52
  %v204 = vunpack.c.h.b16 %v52
  %v205 = vunpack.c.l.b16 %v53
  %v206 = vunpack.c.h.b16 %v53
  %v207 = vpack.c.b16 %v199, %v199
  %v208 = vpack.c.b16 %v200, %v200
  %v209 = vpack.c.b16 %v201, %v201
  %v210 = vpack.c.b16 %v202, %v202
  %v211 = vpack.c.b16 %v203, %v203
  %v212 = vpack.c.b16 %v204, %v204
  %v213 = vpack.c.b16 %v205, %v205
  %v214 = vpack.c.b16 %v206, %v206
  %vm215 = vcmask 64512
  %v217 = vsel %vm215, %v49, 0
  %vm219 = vcmask 1043456
  %v221 = vsel %vm219, %v207, 0
  %v224 = vsel %vm219, %v208, 0
  %v227 = vsel %vm219, %v209, 0
  %v230 = vsel %vm219, %v210, 0
  %v233 = vsel %vm219, %v211, 0
  %v236 = vsel %vm219, %v212, 0
  %v239 = vsel %vm219, %v213, 0
  %v242 = vsel %vm219, %v214, 0
  %244 = vmatpush.bf16.msra.mxu0 0
  %245 = vmatpush.bf16.msra.mxu0 0
  %246 = vmatpush.bf16.msra.mxu0 0
  %247 = vmatpush.bf16.msra.mxu0 0
  %248 = vmatpush.bf16.msra.mxu0 0
  %249 = vmatpush.bf16.msra.mxu0 0
  %250 = vmatpush.bf16.msra.mxu0 0
  %251 = vmatpush.bf16.msra.mxu0 %v221
  %252 = vmatmul.bf16.gmra.mxu0 %v217
  %v253 = vpop.f32.mrf.mxu0
  %v254 = vadd.f32 %v101, %v253
  %v255 = vpop.f32.mrf.mxu0
  %256 = vdwg.mxu0
  %257 = vmatpush.bf16.msra.mxu0 0
  %258 = vmatpush.bf16.msra.mxu0 0
  %259 = vmatpush.bf16.msra.mxu0 0
  %260 = vmatpush.bf16.msra.mxu0 0
  %261 = vmatpush.bf16.msra.mxu0 0
  %262 = vmatpush.bf16.msra.mxu0 0
  %263 = vmatpush.bf16.msra.mxu0 0
  %264 = vmatpush.bf16.msra.mxu0 %v224
  %265 = vmatmul.bf16.gmra.mxu0 %v217
  %v266 = vpop.f32.mrf.mxu0
  %v267 = vadd.f32 %v114, %v266
  %v268 = vpop.f32.mrf.mxu0
  %269 = vdwg.mxu0
  %270 = vmatpush.bf16.msra.mxu0 0
  %271 = vmatpush.bf16.msra.mxu0 0
  %272 = vmatpush.bf16.msra.mxu0 0
  %273 = vmatpush.bf16.msra.mxu0 0
  %274 = vmatpush.bf16.msra.mxu0 0
  %275 = vmatpush.bf16.msra.mxu0 0
  %276 = vmatpush.bf16.msra.mxu0 0
  %277 = vmatpush.bf16.msra.mxu0 %v227
  %278 = vmatmul.bf16.gmra.mxu0 %v217
  %v279 = vpop.f32.mrf.mxu0
  %v280 = vadd.f32 %v127, %v279
  %v281 = vpop.f32.mrf.mxu0
  %282 = vdwg.mxu0
  %283 = vmatpush.bf16.msra.mxu0 0
  %284 = vmatpush.bf16.msra.mxu0 0
  %285 = vmatpush.bf16.msra.mxu0 0
  %286 = vmatpush.bf16.msra.mxu0 0
  %287 = vmatpush.bf16.msra.mxu0 0
  %288 = vmatpush.bf16.msra.mxu0 0
  %289 = vmatpush.bf16.msra.mxu0 0
  %290 = vmatpush.bf16.msra.mxu0 %v230
  %291 = vmatmul.bf16.gmra.mxu0 %v217
  %v292 = vpop.f32.mrf.mxu0
  %v293 = vadd.f32 %v140, %v292
  %v294 = vpop.f32.mrf.mxu0
  %295 = vdwg.mxu0
  %296 = vmatpush.bf16.msra.mxu0 0
  %297 = vmatpush.bf16.msra.mxu0 0
  %298 = vmatpush.bf16.msra.mxu0 0
  %299 = vmatpush.bf16.msra.mxu0 0
  %300 = vmatpush.bf16.msra.mxu0 0
  %301 = vmatpush.bf16.msra.mxu0 0
  %302 = vmatpush.bf16.msra.mxu0 0
  %303 = vmatpush.bf16.msra.mxu0 %v233
  %304 = vmatmul.bf16.gmra.mxu0 %v217
  %v305 = vpop.f32.mrf.mxu0
  %v306 = vadd.f32 %v153, %v305
  %v307 = vpop.f32.mrf.mxu0
  %308 = vdwg.mxu0
  %309 = vmatpush.bf16.msra.mxu0 0
  %310 = vmatpush.bf16.msra.mxu0 0
  %311 = vmatpush.bf16.msra.mxu0 0
  %312 = vmatpush.bf16.msra.mxu0 0
  %313 = vmatpush.bf16.msra.mxu0 0
  %314 = vmatpush.bf16.msra.mxu0 0
  %315 = vmatpush.bf16.msra.mxu0 0
  %316 = vmatpush.bf16.msra.mxu0 %v236
  %317 = vmatmul.bf16.gmra.mxu0 %v217
  %v318 = vpop.f32.mrf.mxu0
  %v319 = vadd.f32 %v166, %v318
  %v320 = vpop.f32.mrf.mxu0
  %321 = vdwg.mxu0
  %322 = vmatpush.bf16.msra.mxu0 0
  %323 = vmatpush.bf16.msra.mxu0 0
  %324 = vmatpush.bf16.msra.mxu0 0
  %325 = vmatpush.bf16.msra.mxu0 0
  %326 = vmatpush.bf16.msra.mxu0 0
  %327 = vmatpush.bf16.msra.mxu0 0
  %328 = vmatpush.bf16.msra.mxu0 0
  %329 = vmatpush.bf16.msra.mxu0 %v239
  %330 = vmatmul.bf16.gmra.mxu0 %v217
  %v331 = vpop.f32.mrf.mxu0
  %v332 = vadd.f32 %v179, %v331
  %v333 = vpop.f32.mrf.mxu0
  %334 = vdwg.mxu0
  %335 = vmatpush.bf16.msra.mxu0 0
  %336 = vmatpush.bf16.msra.mxu0 0
  %337 = vmatpush.bf16.msra.mxu0 0
  %338 = vmatpush.bf16.msra.mxu0 0
  %339 = vmatpush.bf16.msra.mxu0 0
  %340 = vmatpush.bf16.msra.mxu0 0
  %341 = vmatpush.bf16.msra.mxu0 0
  %342 = vmatpush.bf16.msra.mxu0 %v242
  %343 = vmatmul.bf16.gmra.mxu0 %v217
  %v344 = vpop.f32.mrf.mxu0
  %v345 = vadd.f32 %v192, %v344
  %v346 = vpop.f32.mrf.mxu0
  %347 = vdwg.mxu0
  %v348 = vld [vmem:[%s4] sm:$0xff]
  %v350 = vperm.slane %v348, 0
  %v351 = vperm.slane %v348, 1
  %v352 = vperm.slane %v348, 2
  %v353 = vperm.slane %v348, 3
  %v354 = vperm.slane %v348, 4
  %v355 = vperm.slane %v348, 5
  %v356 = vperm.slane %v348, 6
  %v357 = vperm.slane %v348, 7
  %v366 = vadd.f32 %v254, %v350
  %v367 = vadd.f32 %v267, %v351
  %v368 = vadd.f32 %v280, %v352
  %v369 = vadd.f32 %v293, %v353
  %v370 = vadd.f32 %v306, %v354
  %v371 = vadd.f32 %v319, %v355
  %v372 = vadd.f32 %v332, %v356
  %v373 = vadd.f32 %v345, %v357
  %v374 = vmax.f32 %v366, 0.0
  %v375 = vmax.f32 %v367, 0.0
  %v376 = vmax.f32 %v368, 0.0
  %v377 = vmax.f32 %v369, 0.0
  %v378 = vmax.f32 %v370, 0.0
  %v379 = vmax.f32 %v371, 0.0
  %v380 = vmax.f32 %v372, 0.0
  %v381 = vmax.f32 %v373, 0.0
  %v382 = vpack.c.bf16 %v374, %v374
  %v383 = vpack.c.bf16 %v375, %v375
  %v384 = vpack.c.bf16 %v376, %v376
  %v385 = vpack.c.bf16 %v377, %v377
  %v386 = vpack.c.bf16 %v378, %v378
  %v387 = vpack.c.bf16 %v379, %v379
  %v388 = vpack.c.bf16 %v380, %v380
  %v389 = vpack.c.bf16 %v381, %v381
  %v390 = vld [vmem:[%s5] sm:$0xff]
  %v391 = vld [vmem:[%s5 + $0x8] sm:$0xff]
  %v392 = vld [vmem:[%s5 + $0x10] sm:$0xff]
  %v393 = vld [vmem:[%s5 + $0x18] sm:$0xff]
  %v394 = vld [vmem:[%s5 + $0x20] sm:$0xff]
  %v395 = vld [vmem:[%s5 + $0x28] sm:$0xff]
  %v396 = vld [vmem:[%s5 + $0x30] sm:$0xff]
  %v397 = vld [vmem:[%s5 + $0x38] sm:$0xff]
  %v398 = vld [vmem:[%s5 + $0x40] sm:$0xff]
  %v399 = vld [vmem:[%s5 + $0x48] sm:$0xff]
  %v400 = vld [vmem:[%s5 + $0x50] sm:$0xff]
  %v401 = vld [vmem:[%s5 + $0x58] sm:$0xff]
  %v402 = vld [vmem:[%s5 + $0x60] sm:$0xff]
  %v403 = vld [vmem:[%s5 + $0x68] sm:$0xff]
  %v404 = vld [vmem:[%s5 + $0x70] sm:$0xff]
  %v405 = vld [vmem:[%s5 + $0x78] sm:$0xff]
  %v406 = vld [vmem:[%s5 + $0x80] sm:$0xff]
  %v407 = vld [vmem:[%s5 + $0x88] sm:$0xff]
  %v408 = vld [vmem:[%s5 + $0x90] sm:$0xff]
  %v409 = vld [vmem:[%s5 + $0x98] sm:$0xff]
  %v410 = vld [vmem:[%s5 + $0xa0] sm:$0xff]
  %v411 = vld [vmem:[%s5 + $0xa8] sm:$0xff]
  %v412 = vld [vmem:[%s5 + $0xb0] sm:$0xff]
  %v413 = vld [vmem:[%s5 + $0xb8] sm:$0xff]
  %v414 = vld [vmem:[%s5 + $0xc0] sm:$0xff]
  %v415 = vld [vmem:[%s5 + $0xc8] sm:$0xff]
  %v416 = vld [vmem:[%s5 + $0xd0] sm:$0xff]
  %v417 = vld [vmem:[%s5 + $0xd8] sm:$0xff]
  %v418 = vld [vmem:[%s5 + $0xe0] sm:$0xff]
  %v419 = vld [vmem:[%s5 + $0xe8] sm:$0xff]
  %v420 = vld [vmem:[%s5 + $0xf0] sm:$0xff]
  %v421 = vld [vmem:[%s5 + $0xf8] sm:$0xff]
  %v422 = vld [vmem:[%s5 + $0x100] sm:$0xff]
  %v423 = vld [vmem:[%s5 + $0x108] sm:$0xff]
  %v424 = vld [vmem:[%s5 + $0x110] sm:$0xff]
  %v425 = vld [vmem:[%s5 + $0x118] sm:$0xff]
  %v426 = vld [vmem:[%s5 + $0x120] sm:$0xff]
  %v427 = vld [vmem:[%s5 + $0x128] sm:$0xff]
  %v428 = vld [vmem:[%s5 + $0x130] sm:$0xff]
  %v429 = vld [vmem:[%s5 + $0x138] sm:$0xff]
  %v430 = vld [vmem:[%s5 + $0x140] sm:$0xff]
  %v431 = vld [vmem:[%s5 + $0x148] sm:$0xff]
  %v432 = vld [vmem:[%s5 + $0x150] sm:$0xff]
  %v433 = vld [vmem:[%s5 + $0x158] sm:$0xff]
  %v434 = vld [vmem:[%s5 + $0x160] sm:$0xff]
  %v435 = vld [vmem:[%s5 + $0x168] sm:$0xff]
  %v436 = vld [vmem:[%s5 + $0x170] sm:$0xff]
  %v437 = vld [vmem:[%s5 + $0x178] sm:$0xff]
  %v438 = vld [vmem:[%s5 + $0x180] sm:$0xff]
  %v439 = vld [vmem:[%s5 + $0x188] sm:$0xff]
  %v440 = vld [vmem:[%s5 + $0x190] sm:$0xff]
  %v441 = vld [vmem:[%s5 + $0x198] sm:$0xff]
  %v442 = vld [vmem:[%s5 + $0x1a0] sm:$0xff]
  %v443 = vld [vmem:[%s5 + $0x1a8] sm:$0xff]
  %v444 = vld [vmem:[%s5 + $0x1b0] sm:$0xff]
  %v445 = vld [vmem:[%s5 + $0x1b8] sm:$0xff]
  %v446 = vld [vmem:[%s5 + $0x1c0] sm:$0xff]
  %v447 = vld [vmem:[%s5 + $0x1c8] sm:$0xff]
  %v448 = vld [vmem:[%s5 + $0x1d0] sm:$0xff]
  %v449 = vld [vmem:[%s5 + $0x1d8] sm:$0xff]
  %v450 = vld [vmem:[%s5 + $0x1e0] sm:$0xff]
  %v451 = vld [vmem:[%s5 + $0x1e8] sm:$0xff]
  %v452 = vld [vmem:[%s5 + $0x1f0] sm:$0xff]
  %v453 = vld [vmem:[%s5 + $0x1f8] sm:$0xff]
  %v454 = vld [vmem:[%s5 + $0x200] sm:$0xff]
  %v455 = vld [vmem:[%s5 + $0x208] sm:$0xff]
  %v456 = vld [vmem:[%s5 + $0x210] sm:$0xff]
  %v457 = vld [vmem:[%s5 + $0x218] sm:$0xff]
  %v458 = vld [vmem:[%s5 + $0x220] sm:$0xff]
  %v459 = vld [vmem:[%s5 + $0x228] sm:$0xff]
  %v460 = vld [vmem:[%s5 + $0x230] sm:$0xff]
  %v461 = vld [vmem:[%s5 + $0x238] sm:$0xff]
  %v462 = vld [vmem:[%s5 + $0x240] sm:$0xff]
  %v463 = vld [vmem:[%s5 + $0x248] sm:$0xff]
  %v464 = vld [vmem:[%s5 + $0x250] sm:$0xff]
  %v465 = vld [vmem:[%s5 + $0x258] sm:$0xff]
  %v466 = vld [vmem:[%s5 + $0x260] sm:$0xff]
  %v467 = vld [vmem:[%s5 + $0x268] sm:$0xff]
  %v468 = vld [vmem:[%s5 + $0x270] sm:$0xff]
  %v469 = vld [vmem:[%s5 + $0x278] sm:$0xff]
  %v470 = vld [vmem:[%s5 + $0x280] sm:$0xff]
  %v471 = vld [vmem:[%s5 + $0x288] sm:$0xff]
  %v472 = vld [vmem:[%s5 + $0x290] sm:$0xff]
  %v473 = vld [vmem:[%s5 + $0x298] sm:$0xff]
  %v474 = vld [vmem:[%s5 + $0x2a0] sm:$0xff]
  %v475 = vld [vmem:[%s5 + $0x2a8] sm:$0xff]
  %v476 = vld [vmem:[%s5 + $0x2b0] sm:$0xff]
  %v477 = vld [vmem:[%s5 + $0x2b8] sm:$0xff]
  %v478 = vld [vmem:[%s5 + $0x2c0] sm:$0xff]
  %v479 = vld [vmem:[%s5 + $0x2c8] sm:$0xff]
  %v480 = vld [vmem:[%s5 + $0x2d0] sm:$0xff]
  %v481 = vld [vmem:[%s5 + $0x2d8] sm:$0xff]
  %v482 = vld [vmem:[%s5 + $0x2e0] sm:$0xff]
  %v483 = vld [vmem:[%s5 + $0x2e8] sm:$0xff]
  %v484 = vld [vmem:[%s5 + $0x2f0] sm:$0xff]
  %v485 = vld [vmem:[%s5 + $0x2f8] sm:$0xff]
  %v486 = vld [vmem:[%s5 + $0x300] sm:$0xff]
  %v487 = vld [vmem:[%s5 + $0x308] sm:$0xff]
  %v488 = vld [vmem:[%s5 + $0x310] sm:$0xff]
  %v489 = vld [vmem:[%s5 + $0x318] sm:$0xff]
  %v490 = vld [vmem:[%s5 + $0x320] sm:$0xff]
  %v491 = vld [vmem:[%s5 + $0x328] sm:$0xff]
  %v492 = vld [vmem:[%s5 + $0x330] sm:$0xff]
  %v493 = vld [vmem:[%s5 + $0x338] sm:$0xff]
  %v494 = vld [vmem:[%s5 + $0x340] sm:$0xff]
  %v495 = vld [vmem:[%s5 + $0x348] sm:$0xff]
  %v496 = vld [vmem:[%s5 + $0x350] sm:$0xff]
  %v497 = vld [vmem:[%s5 + $0x358] sm:$0xff]
  %v498 = vld [vmem:[%s5 + $0x360] sm:$0xff]
  %v499 = vld [vmem:[%s5 + $0x368] sm:$0xff]
  %v500 = vld [vmem:[%s5 + $0x370] sm:$0xff]
  %v501 = vld [vmem:[%s5 + $0x378] sm:$0xff]
  %v502 = vld [vmem:[%s5 + $0x380] sm:$0xff]
  %v503 = vld [vmem:[%s5 + $0x388] sm:$0xff]
  %v504 = vld [vmem:[%s5 + $0x390] sm:$0xff]
  %v505 = vld [vmem:[%s5 + $0x398] sm:$0xff]
  %v506 = vld [vmem:[%s5 + $0x3a0] sm:$0xff]
  %v507 = vld [vmem:[%s5 + $0x3a8] sm:$0xff]
  %v508 = vld [vmem:[%s5 + $0x3b0] sm:$0xff]
  %v509 = vld [vmem:[%s5 + $0x3b8] sm:$0xff]
  %v510 = vld [vmem:[%s5 + $0x3c0] sm:$0xff]
  %v511 = vld [vmem:[%s5 + $0x3c8] sm:$0xff]
  %v512 = vld [vmem:[%s5 + $0x3d0] sm:$0xff]
  %v513 = vld [vmem:[%s5 + $0x3d8] sm:$0xff]
  %v514 = vld [vmem:[%s5 + $0x3e0] sm:$0xff]
  %v515 = vld [vmem:[%s5 + $0x3e8] sm:$0xff]
  %v516 = vld [vmem:[%s5 + $0x3f0] sm:$0xff]
  %v517 = vld [vmem:[%s5 + $0x3f8] sm:$0xff]
  %v518 = vld [vmem:[%s6] sm:$0xf]
  %v520 = vperm.slane %v518, 0
  %v521 = vperm.slane %v518, 1
  %v522 = vperm.slane %v518, 2
  %v523 = vperm.slane %v518, 3
  %v656 = vunpack.c.l.b16 %v390
  %v657 = vunpack.c.h.b16 %v390
  %v658 = vunpack.c.l.b16 %v391
  %v659 = vunpack.c.h.b16 %v391
  %v660 = vunpack.c.l.b16 %v392
  %v661 = vunpack.c.h.b16 %v392
  %v662 = vunpack.c.l.b16 %v393
  %v663 = vunpack.c.h.b16 %v393
  %v664 = vunpack.c.l.b16 %v394
  %v665 = vunpack.c.h.b16 %v394
  %v666 = vunpack.c.l.b16 %v395
  %v667 = vunpack.c.h.b16 %v395
  %v668 = vunpack.c.l.b16 %v396
  %v669 = vunpack.c.h.b16 %v396
  %v670 = vunpack.c.l.b16 %v397
  %v671 = vunpack.c.h.b16 %v397
  %v672 = vunpack.c.l.b16 %v398
  %v673 = vunpack.c.h.b16 %v398
  %v674 = vunpack.c.l.b16 %v399
  %v675 = vunpack.c.h.b16 %v399
  %v676 = vunpack.c.l.b16 %v400
  %v677 = vunpack.c.h.b16 %v400
  %v678 = vunpack.c.l.b16 %v401
  %v679 = vunpack.c.h.b16 %v401
  %v680 = vunpack.c.l.b16 %v402
  %v681 = vunpack.c.h.b16 %v402
  %v682 = vunpack.c.l.b16 %v403
  %v683 = vunpack.c.h.b16 %v403
  %v684 = vunpack.c.l.b16 %v404
  %v685 = vunpack.c.h.b16 %v404
  %v686 = vunpack.c.l.b16 %v405
  %v687 = vunpack.c.h.b16 %v405
  %v688 = vunpack.c.l.b16 %v406
  %v689 = vunpack.c.h.b16 %v406
  %v690 = vunpack.c.l.b16 %v407
  %v691 = vunpack.c.h.b16 %v407
  %v692 = vunpack.c.l.b16 %v408
  %v693 = vunpack.c.h.b16 %v408
  %v694 = vunpack.c.l.b16 %v409
  %v695 = vunpack.c.h.b16 %v409
  %v696 = vunpack.c.l.b16 %v410
  %v697 = vunpack.c.h.b16 %v410
  %v698 = vunpack.c.l.b16 %v411
  %v699 = vunpack.c.h.b16 %v411
  %v700 = vunpack.c.l.b16 %v412
  %v701 = vunpack.c.h.b16 %v412
  %v702 = vunpack.c.l.b16 %v413
  %v703 = vunpack.c.h.b16 %v413
  %v704 = vunpack.c.l.b16 %v414
  %v705 = vunpack.c.h.b16 %v414
  %v706 = vunpack.c.l.b16 %v415
  %v707 = vunpack.c.h.b16 %v415
  %v708 = vunpack.c.l.b16 %v416
  %v709 = vunpack.c.h.b16 %v416
  %v710 = vunpack.c.l.b16 %v417
  %v711 = vunpack.c.h.b16 %v417
  %v712 = vunpack.c.l.b16 %v418
  %v713 = vunpack.c.h.b16 %v418
  %v714 = vunpack.c.l.b16 %v419
  %v715 = vunpack.c.h.b16 %v419
  %v716 = vunpack.c.l.b16 %v420
  %v717 = vunpack.c.h.b16 %v420
  %v718 = vunpack.c.l.b16 %v421
  %v719 = vunpack.c.h.b16 %v421
  %v720 = vunpack.c.l.b16 %v422
  %v721 = vunpack.c.h.b16 %v422
  %v722 = vunpack.c.l.b16 %v423
  %v723 = vunpack.c.h.b16 %v423
  %v724 = vunpack.c.l.b16 %v424
  %v725 = vunpack.c.h.b16 %v424
  %v726 = vunpack.c.l.b16 %v425
  %v727 = vunpack.c.h.b16 %v425
  %v728 = vunpack.c.l.b16 %v426
  %v729 = vunpack.c.h.b16 %v426
  %v730 = vunpack.c.l.b16 %v427
  %v731 = vunpack.c.h.b16 %v427
  %v732 = vunpack.c.l.b16 %v428
  %v733 = vunpack.c.h.b16 %v428
  %v734 = vunpack.c.l.b16 %v429
  %v735 = vunpack.c.h.b16 %v429
  %v736 = vunpack.c.l.b16 %v430
  %v737 = vunpack.c.h.b16 %v430
  %v738 = vunpack.c.l.b16 %v431
  %v739 = vunpack.c.h.b16 %v431
  %v740 = vunpack.c.l.b16 %v432
  %v741 = vunpack.c.h.b16 %v432
  %v742 = vunpack.c.l.b16 %v433
  %v743 = vunpack.c.h.b16 %v433
  %v744 = vunpack.c.l.b16 %v434
  %v745 = vunpack.c.h.b16 %v434
  %v746 = vunpack.c.l.b16 %v435
  %v747 = vunpack.c.h.b16 %v435
  %v748 = vunpack.c.l.b16 %v436
  %v749 = vunpack.c.h.b16 %v436
  %v750 = vunpack.c.l.b16 %v437
  %v751 = vunpack.c.h.b16 %v437
  %v752 = vunpack.c.l.b16 %v438
  %v753 = vunpack.c.h.b16 %v438
  %v754 = vunpack.c.l.b16 %v439
  %v755 = vunpack.c.h.b16 %v439
  %v756 = vunpack.c.l.b16 %v440
  %v757 = vunpack.c.h.b16 %v440
  %v758 = vunpack.c.l.b16 %v441
  %v759 = vunpack.c.h.b16 %v441
  %v760 = vunpack.c.l.b16 %v442
  %v761 = vunpack.c.h.b16 %v442
  %v762 = vunpack.c.l.b16 %v443
  %v763 = vunpack.c.h.b16 %v443
  %v764 = vunpack.c.l.b16 %v444
  %v765 = vunpack.c.h.b16 %v444
  %v766 = vunpack.c.l.b16 %v445
  %v767 = vunpack.c.h.b16 %v445
  %v768 = vunpack.c.l.b16 %v446
  %v769 = vunpack.c.h.b16 %v446
  %v770 = vunpack.c.l.b16 %v447
  %v771 = vunpack.c.h.b16 %v447
  %v772 = vunpack.c.l.b16 %v448
  %v773 = vunpack.c.h.b16 %v448
  %v774 = vunpack.c.l.b16 %v449
  %v775 = vunpack.c.h.b16 %v449
  %v776 = vunpack.c.l.b16 %v450
  %v777 = vunpack.c.h.b16 %v450
  %v778 = vunpack.c.l.b16 %v451
  %v779 = vunpack.c.h.b16 %v451
  %v780 = vunpack.c.l.b16 %v452
  %v781 = vunpack.c.h.b16 %v452
  %v782 = vunpack.c.l.b16 %v453
  %v783 = vunpack.c.h.b16 %v453
  %v784 = vunpack.c.l.b16 %v454
  %v785 = vunpack.c.h.b16 %v454
  %v786 = vunpack.c.l.b16 %v455
  %v787 = vunpack.c.h.b16 %v455
  %v788 = vunpack.c.l.b16 %v456
  %v789 = vunpack.c.h.b16 %v456
  %v790 = vunpack.c.l.b16 %v457
  %v791 = vunpack.c.h.b16 %v457
  %v792 = vunpack.c.l.b16 %v458
  %v793 = vunpack.c.h.b16 %v458
  %v794 = vunpack.c.l.b16 %v459
  %v795 = vunpack.c.h.b16 %v459
  %v796 = vunpack.c.l.b16 %v460
  %v797 = vunpack.c.h.b16 %v460
  %v798 = vunpack.c.l.b16 %v461
  %v799 = vunpack.c.h.b16 %v461
  %v800 = vunpack.c.l.b16 %v462
  %v801 = vunpack.c.h.b16 %v462
  %v802 = vunpack.c.l.b16 %v463
  %v803 = vunpack.c.h.b16 %v463
  %v804 = vunpack.c.l.b16 %v464
  %v805 = vunpack.c.h.b16 %v464
  %v806 = vunpack.c.l.b16 %v465
  %v807 = vunpack.c.h.b16 %v465
  %v808 = vunpack.c.l.b16 %v466
  %v809 = vunpack.c.h.b16 %v466
  %v810 = vunpack.c.l.b16 %v467
  %v811 = vunpack.c.h.b16 %v467
  %v812 = vunpack.c.l.b16 %v468
  %v813 = vunpack.c.h.b16 %v468
  %v814 = vunpack.c.l.b16 %v469
  %v815 = vunpack.c.h.b16 %v469
  %v816 = vunpack.c.l.b16 %v470
  %v817 = vunpack.c.h.b16 %v470
  %v818 = vunpack.c.l.b16 %v471
  %v819 = vunpack.c.h.b16 %v471
  %v820 = vunpack.c.l.b16 %v472
  %v821 = vunpack.c.h.b16 %v472
  %v822 = vunpack.c.l.b16 %v473
  %v823 = vunpack.c.h.b16 %v473
  %v824 = vunpack.c.l.b16 %v474
  %v825 = vunpack.c.h.b16 %v474
  %v826 = vunpack.c.l.b16 %v475
  %v827 = vunpack.c.h.b16 %v475
  %v828 = vunpack.c.l.b16 %v476
  %v829 = vunpack.c.h.b16 %v476
  %v830 = vunpack.c.l.b16 %v477
  %v831 = vunpack.c.h.b16 %v477
  %v832 = vunpack.c.l.b16 %v478
  %v833 = vunpack.c.h.b16 %v478
  %v834 = vunpack.c.l.b16 %v479
  %v835 = vunpack.c.h.b16 %v479
  %v836 = vunpack.c.l.b16 %v480
  %v837 = vunpack.c.h.b16 %v480
  %v838 = vunpack.c.l.b16 %v481
  %v839 = vunpack.c.h.b16 %v481
  %v840 = vunpack.c.l.b16 %v482
  %v841 = vunpack.c.h.b16 %v482
  %v842 = vunpack.c.l.b16 %v483
  %v843 = vunpack.c.h.b16 %v483
  %v844 = vunpack.c.l.b16 %v484
  %v845 = vunpack.c.h.b16 %v484
  %v846 = vunpack.c.l.b16 %v485
  %v847 = vunpack.c.h.b16 %v485
  %v848 = vunpack.c.l.b16 %v486
  %v849 = vunpack.c.h.b16 %v486
  %v850 = vunpack.c.l.b16 %v487
  %v851 = vunpack.c.h.b16 %v487
  %v852 = vunpack.c.l.b16 %v488
  %v853 = vunpack.c.h.b16 %v488
  %v854 = vunpack.c.l.b16 %v489
  %v855 = vunpack.c.h.b16 %v489
  %v856 = vunpack.c.l.b16 %v490
  %v857 = vunpack.c.h.b16 %v490
  %v858 = vunpack.c.l.b16 %v491
  %v859 = vunpack.c.h.b16 %v491
  %v860 = vunpack.c.l.b16 %v492
  %v861 = vunpack.c.h.b16 %v492
  %v862 = vunpack.c.l.b16 %v493
  %v863 = vunpack.c.h.b16 %v493
  %v864 = vunpack.c.l.b16 %v494
  %v865 = vunpack.c.h.b16 %v494
  %v866 = vunpack.c.l.b16 %v495
  %v867 = vunpack.c.h.b16 %v495
  %v868 = vunpack.c.l.b16 %v496
  %v869 = vunpack.c.h.b16 %v496
  %v870 = vunpack.c.l.b16 %v497
  %v871 = vunpack.c.h.b16 %v497
  %v872 = vunpack.c.l.b16 %v498
  %v873 = vunpack.c.h.b16 %v498
  %v874 = vunpack.c.l.b16 %v499
  %v875 = vunpack.c.h.b16 %v499
  %v876 = vunpack.c.l.b16 %v500
  %v877 = vunpack.c.h.b16 %v500
  %v878 = vunpack.c.l.b16 %v501
  %v879 = vunpack.c.h.b16 %v501
  %v880 = vunpack.c.l.b16 %v502
  %v881 = vunpack.c.h.b16 %v502
  %v882 = vunpack.c.l.b16 %v503
  %v883 = vunpack.c.h.b16 %v503
  %v884 = vunpack.c.l.b16 %v504
  %v885 = vunpack.c.h.b16 %v504
  %v886 = vunpack.c.l.b16 %v505
  %v887 = vunpack.c.h.b16 %v505
  %v888 = vunpack.c.l.b16 %v506
  %v889 = vunpack.c.h.b16 %v506
  %v890 = vunpack.c.l.b16 %v507
  %v891 = vunpack.c.h.b16 %v507
  %v892 = vunpack.c.l.b16 %v508
  %v893 = vunpack.c.h.b16 %v508
  %v894 = vunpack.c.l.b16 %v509
  %v895 = vunpack.c.h.b16 %v509
  %v896 = vunpack.c.l.b16 %v510
  %v897 = vunpack.c.h.b16 %v510
  %v898 = vunpack.c.l.b16 %v511
  %v899 = vunpack.c.h.b16 %v511
  %v900 = vunpack.c.l.b16 %v512
  %v901 = vunpack.c.h.b16 %v512
  %v902 = vunpack.c.l.b16 %v513
  %v903 = vunpack.c.h.b16 %v513
  %v904 = vunpack.c.l.b16 %v514
  %v905 = vunpack.c.h.b16 %v514
  %v906 = vunpack.c.l.b16 %v515
  %v907 = vunpack.c.h.b16 %v515
  %v908 = vunpack.c.l.b16 %v516
  %v909 = vunpack.c.h.b16 %v516
  %v910 = vunpack.c.l.b16 %v517
  %v911 = vunpack.c.h.b16 %v517
  %v912 = vpack.c.b16 %v660, %v656
  %v913 = vpack.c.b16 %v661, %v657
  %v914 = vpack.c.b16 %v662, %v658
  %v915 = vpack.c.b16 %v663, %v659
  %v916 = vpack.c.b16 %v668, %v664
  %v917 = vpack.c.b16 %v669, %v665
  %v918 = vpack.c.b16 %v670, %v666
  %v919 = vpack.c.b16 %v671, %v667
  %v920 = vpack.c.b16 %v676, %v672
  %v921 = vpack.c.b16 %v677, %v673
  %v922 = vpack.c.b16 %v678, %v674
  %v923 = vpack.c.b16 %v679, %v675
  %v924 = vpack.c.b16 %v684, %v680
  %v925 = vpack.c.b16 %v685, %v681
  %v926 = vpack.c.b16 %v686, %v682
  %v927 = vpack.c.b16 %v687, %v683
  %v928 = vpack.c.b16 %v692, %v688
  %v929 = vpack.c.b16 %v693, %v689
  %v930 = vpack.c.b16 %v694, %v690
  %v931 = vpack.c.b16 %v695, %v691
  %v932 = vpack.c.b16 %v700, %v696
  %v933 = vpack.c.b16 %v701, %v697
  %v934 = vpack.c.b16 %v702, %v698
  %v935 = vpack.c.b16 %v703, %v699
  %v936 = vpack.c.b16 %v708, %v704
  %v937 = vpack.c.b16 %v709, %v705
  %v938 = vpack.c.b16 %v710, %v706
  %v939 = vpack.c.b16 %v711, %v707
  %v940 = vpack.c.b16 %v716, %v712
  %v941 = vpack.c.b16 %v717, %v713
  %v942 = vpack.c.b16 %v718, %v714
  %v943 = vpack.c.b16 %v719, %v715
  %v944 = vpack.c.b16 %v724, %v720
  %v945 = vpack.c.b16 %v725, %v721
  %v946 = vpack.c.b16 %v726, %v722
  %v947 = vpack.c.b16 %v727, %v723
  %v948 = vpack.c.b16 %v732, %v728
  %v949 = vpack.c.b16 %v733, %v729
  %v950 = vpack.c.b16 %v734, %v730
  %v951 = vpack.c.b16 %v735, %v731
  %v952 = vpack.c.b16 %v740, %v736
  %v953 = vpack.c.b16 %v741, %v737
  %v954 = vpack.c.b16 %v742, %v738
  %v955 = vpack.c.b16 %v743, %v739
  %v956 = vpack.c.b16 %v748, %v744
  %v957 = vpack.c.b16 %v749, %v745
  %v958 = vpack.c.b16 %v750, %v746
  %v959 = vpack.c.b16 %v751, %v747
  %v960 = vpack.c.b16 %v756, %v752
  %v961 = vpack.c.b16 %v757, %v753
  %v962 = vpack.c.b16 %v758, %v754
  %v963 = vpack.c.b16 %v759, %v755
  %v964 = vpack.c.b16 %v764, %v760
  %v965 = vpack.c.b16 %v765, %v761
  %v966 = vpack.c.b16 %v766, %v762
  %v967 = vpack.c.b16 %v767, %v763
  %v968 = vpack.c.b16 %v772, %v768
  %v969 = vpack.c.b16 %v773, %v769
  %v970 = vpack.c.b16 %v774, %v770
  %v971 = vpack.c.b16 %v775, %v771
  %v972 = vpack.c.b16 %v780, %v776
  %v973 = vpack.c.b16 %v781, %v777
  %v974 = vpack.c.b16 %v782, %v778
  %v975 = vpack.c.b16 %v783, %v779
  %v976 = vpack.c.b16 %v788, %v784
  %v977 = vpack.c.b16 %v789, %v785
  %v978 = vpack.c.b16 %v790, %v786
  %v979 = vpack.c.b16 %v791, %v787
  %v980 = vpack.c.b16 %v796, %v792
  %v981 = vpack.c.b16 %v797, %v793
  %v982 = vpack.c.b16 %v798, %v794
  %v983 = vpack.c.b16 %v799, %v795
  %v984 = vpack.c.b16 %v804, %v800
  %v985 = vpack.c.b16 %v805, %v801
  %v986 = vpack.c.b16 %v806, %v802
  %v987 = vpack.c.b16 %v807, %v803
  %v988 = vpack.c.b16 %v812, %v808
  %v989 = vpack.c.b16 %v813, %v809
  %v990 = vpack.c.b16 %v814, %v810
  %v991 = vpack.c.b16 %v815, %v811
  %v992 = vpack.c.b16 %v820, %v816
  %v993 = vpack.c.b16 %v821, %v817
  %v994 = vpack.c.b16 %v822, %v818
  %v995 = vpack.c.b16 %v823, %v819
  %v996 = vpack.c.b16 %v828, %v824
  %v997 = vpack.c.b16 %v829, %v825
  %v998 = vpack.c.b16 %v830, %v826
  %v999 = vpack.c.b16 %v831, %v827
  %v1000 = vpack.c.b16 %v836, %v832
  %v1001 = vpack.c.b16 %v837, %v833
  %v1002 = vpack.c.b16 %v838, %v834
  %v1003 = vpack.c.b16 %v839, %v835
  %v1004 = vpack.c.b16 %v844, %v840
  %v1005 = vpack.c.b16 %v845, %v841
  %v1006 = vpack.c.b16 %v846, %v842
  %v1007 = vpack.c.b16 %v847, %v843
  %v1008 = vpack.c.b16 %v852, %v848
  %v1009 = vpack.c.b16 %v853, %v849
  %v1010 = vpack.c.b16 %v854, %v850
  %v1011 = vpack.c.b16 %v855, %v851
  %v1012 = vpack.c.b16 %v860, %v856
  %v1013 = vpack.c.b16 %v861, %v857
  %v1014 = vpack.c.b16 %v862, %v858
  %v1015 = vpack.c.b16 %v863, %v859
  %v1016 = vpack.c.b16 %v868, %v864
  %v1017 = vpack.c.b16 %v869, %v865
  %v1018 = vpack.c.b16 %v870, %v866
  %v1019 = vpack.c.b16 %v871, %v867
  %v1020 = vpack.c.b16 %v876, %v872
  %v1021 = vpack.c.b16 %v877, %v873
  %v1022 = vpack.c.b16 %v878, %v874
  %v1023 = vpack.c.b16 %v879, %v875
  %v1024 = vpack.c.b16 %v884, %v880
  %v1025 = vpack.c.b16 %v885, %v881
  %v1026 = vpack.c.b16 %v886, %v882
  %v1027 = vpack.c.b16 %v887, %v883
  %v1028 = vpack.c.b16 %v892, %v888
  %v1029 = vpack.c.b16 %v893, %v889
  %v1030 = vpack.c.b16 %v894, %v890
  %v1031 = vpack.c.b16 %v895, %v891
  %v1032 = vpack.c.b16 %v900, %v896
  %v1033 = vpack.c.b16 %v901, %v897
  %v1034 = vpack.c.b16 %v902, %v898
  %v1035 = vpack.c.b16 %v903, %v899
  %v1036 = vpack.c.b16 %v908, %v904
  %v1037 = vpack.c.b16 %v909, %v905
  %v1038 = vpack.c.b16 %v910, %v906
  %v1039 = vpack.c.b16 %v911, %v907
  %1168 = vmatpush.bf16.msra.mxu0 %v940
  %1169 = vmatpush.bf16.msra.mxu0 %v936
  %1170 = vmatpush.bf16.msra.mxu0 %v932
  %1171 = vmatpush.bf16.msra.mxu0 %v928
  %1172 = vmatpush.bf16.msra.mxu0 %v924
  %1173 = vmatpush.bf16.msra.mxu0 %v920
  %1174 = vmatpush.bf16.msra.mxu0 %v916
  %1175 = vmatpush.bf16.msra.mxu0 %v912
  %1176 = vmatmul.bf16.gmra.mxu0 %v382
  %v1177 = vpop.f32.mrf.mxu0
  %v1178 = vadd.f32 %v520, %v1177
  %v1179 = vpop.f32.mrf.mxu0
  %1180 = vdwg.mxu0
  %1181 = vmatpush.bf16.msra.mxu0 %v972
  %1182 = vmatpush.bf16.msra.mxu0 %v968
  %1183 = vmatpush.bf16.msra.mxu0 %v964
  %1184 = vmatpush.bf16.msra.mxu0 %v960
  %1185 = vmatpush.bf16.msra.mxu0 %v956
  %1186 = vmatpush.bf16.msra.mxu0 %v952
  %1187 = vmatpush.bf16.msra.mxu0 %v948
  %1188 = vmatpush.bf16.msra.mxu0 %v944
  %1189 = vmatmul.bf16.gmra.mxu0 %v383
  %v1190 = vpop.f32.mrf.mxu0
  %v1191 = vadd.f32 %v1178, %v1190
  %v1192 = vpop.f32.mrf.mxu0
  %1193 = vdwg.mxu0
  %1194 = vmatpush.bf16.msra.mxu0 %v1004
  %1195 = vmatpush.bf16.msra.mxu0 %v1000
  %1196 = vmatpush.bf16.msra.mxu0 %v996
  %1197 = vmatpush.bf16.msra.mxu0 %v992
  %1198 = vmatpush.bf16.msra.mxu0 %v988
  %1199 = vmatpush.bf16.msra.mxu0 %v984
  %1200 = vmatpush.bf16.msra.mxu0 %v980
  %1201 = vmatpush.bf16.msra.mxu0 %v976
  %1202 = vmatmul.bf16.gmra.mxu0 %v384
  %v1203 = vpop.f32.mrf.mxu0
  %v1204 = vadd.f32 %v1191, %v1203
  %v1205 = vpop.f32.mrf.mxu0
  %1206 = vdwg.mxu0
  %1207 = vmatpush.bf16.msra.mxu0 %v1036
  %1208 = vmatpush.bf16.msra.mxu0 %v1032
  %1209 = vmatpush.bf16.msra.mxu0 %v1028
  %1210 = vmatpush.bf16.msra.mxu0 %v1024
  %1211 = vmatpush.bf16.msra.mxu0 %v1020
  %1212 = vmatpush.bf16.msra.mxu0 %v1016
  %1213 = vmatpush.bf16.msra.mxu0 %v1012
  %1214 = vmatpush.bf16.msra.mxu0 %v1008
  %1215 = vmatmul.bf16.gmra.mxu0 %v385
  %v1216 = vpop.f32.mrf.mxu0
  %v1217 = vadd.f32 %v1204, %v1216
  %v1218 = vpop.f32.mrf.mxu0
  %1219 = vdwg.mxu0
  %1220 = vmatpush.bf16.msra.mxu0 %v941
  %1221 = vmatpush.bf16.msra.mxu0 %v937
  %1222 = vmatpush.bf16.msra.mxu0 %v933
  %1223 = vmatpush.bf16.msra.mxu0 %v929
  %1224 = vmatpush.bf16.msra.mxu0 %v925
  %1225 = vmatpush.bf16.msra.mxu0 %v921
  %1226 = vmatpush.bf16.msra.mxu0 %v917
  %1227 = vmatpush.bf16.msra.mxu0 %v913
  %1228 = vmatmul.bf16.gmra.mxu0 %v382
  %v1229 = vpop.f32.mrf.mxu0
  %v1230 = vadd.f32 %v521, %v1229
  %v1231 = vpop.f32.mrf.mxu0
  %1232 = vdwg.mxu0
  %1233 = vmatpush.bf16.msra.mxu0 %v973
  %1234 = vmatpush.bf16.msra.mxu0 %v969
  %1235 = vmatpush.bf16.msra.mxu0 %v965
  %1236 = vmatpush.bf16.msra.mxu0 %v961
  %1237 = vmatpush.bf16.msra.mxu0 %v957
  %1238 = vmatpush.bf16.msra.mxu0 %v953
  %1239 = vmatpush.bf16.msra.mxu0 %v949
  %1240 = vmatpush.bf16.msra.mxu0 %v945
  %1241 = vmatmul.bf16.gmra.mxu0 %v383
  %v1242 = vpop.f32.mrf.mxu0
  %v1243 = vadd.f32 %v1230, %v1242
  %v1244 = vpop.f32.mrf.mxu0
  %1245 = vdwg.mxu0
  %1246 = vmatpush.bf16.msra.mxu0 %v1005
  %1247 = vmatpush.bf16.msra.mxu0 %v1001
  %1248 = vmatpush.bf16.msra.mxu0 %v997
  %1249 = vmatpush.bf16.msra.mxu0 %v993
  %1250 = vmatpush.bf16.msra.mxu0 %v989
  %1251 = vmatpush.bf16.msra.mxu0 %v985
  %1252 = vmatpush.bf16.msra.mxu0 %v981
  %1253 = vmatpush.bf16.msra.mxu0 %v977
  %1254 = vmatmul.bf16.gmra.mxu0 %v384
  %v1255 = vpop.f32.mrf.mxu0
  %v1256 = vadd.f32 %v1243, %v1255
  %v1257 = vpop.f32.mrf.mxu0
  %1258 = vdwg.mxu0
  %1259 = vmatpush.bf16.msra.mxu0 %v1037
  %1260 = vmatpush.bf16.msra.mxu0 %v1033
  %1261 = vmatpush.bf16.msra.mxu0 %v1029
  %1262 = vmatpush.bf16.msra.mxu0 %v1025
  %1263 = vmatpush.bf16.msra.mxu0 %v1021
  %1264 = vmatpush.bf16.msra.mxu0 %v1017
  %1265 = vmatpush.bf16.msra.mxu0 %v1013
  %1266 = vmatpush.bf16.msra.mxu0 %v1009
  %1267 = vmatmul.bf16.gmra.mxu0 %v385
  %v1268 = vpop.f32.mrf.mxu0
  %v1269 = vadd.f32 %v1256, %v1268
  %v1270 = vpop.f32.mrf.mxu0
  %1271 = vdwg.mxu0
  %1272 = vmatpush.bf16.msra.mxu0 %v942
  %1273 = vmatpush.bf16.msra.mxu0 %v938
  %1274 = vmatpush.bf16.msra.mxu0 %v934
  %1275 = vmatpush.bf16.msra.mxu0 %v930
  %1276 = vmatpush.bf16.msra.mxu0 %v926
  %1277 = vmatpush.bf16.msra.mxu0 %v922
  %1278 = vmatpush.bf16.msra.mxu0 %v918
  %1279 = vmatpush.bf16.msra.mxu0 %v914
  %1280 = vmatmul.bf16.gmra.mxu0 %v382
  %v1281 = vpop.f32.mrf.mxu0
  %v1282 = vadd.f32 %v522, %v1281
  %v1283 = vpop.f32.mrf.mxu0
  %1284 = vdwg.mxu0
  %1285 = vmatpush.bf16.msra.mxu0 %v974
  %1286 = vmatpush.bf16.msra.mxu0 %v970
  %1287 = vmatpush.bf16.msra.mxu0 %v966
  %1288 = vmatpush.bf16.msra.mxu0 %v962
  %1289 = vmatpush.bf16.msra.mxu0 %v958
  %1290 = vmatpush.bf16.msra.mxu0 %v954
  %1291 = vmatpush.bf16.msra.mxu0 %v950
  %1292 = vmatpush.bf16.msra.mxu0 %v946
  %1293 = vmatmul.bf16.gmra.mxu0 %v383
  %v1294 = vpop.f32.mrf.mxu0
  %v1295 = vadd.f32 %v1282, %v1294
  %v1296 = vpop.f32.mrf.mxu0
  %1297 = vdwg.mxu0
  %1298 = vmatpush.bf16.msra.mxu0 %v1006
  %1299 = vmatpush.bf16.msra.mxu0 %v1002
  %1300 = vmatpush.bf16.msra.mxu0 %v998
  %1301 = vmatpush.bf16.msra.mxu0 %v994
  %1302 = vmatpush.bf16.msra.mxu0 %v990
  %1303 = vmatpush.bf16.msra.mxu0 %v986
  %1304 = vmatpush.bf16.msra.mxu0 %v982
  %1305 = vmatpush.bf16.msra.mxu0 %v978
  %1306 = vmatmul.bf16.gmra.mxu0 %v384
  %v1307 = vpop.f32.mrf.mxu0
  %v1308 = vadd.f32 %v1295, %v1307
  %v1309 = vpop.f32.mrf.mxu0
  %1310 = vdwg.mxu0
  %1311 = vmatpush.bf16.msra.mxu0 %v1038
  %1312 = vmatpush.bf16.msra.mxu0 %v1034
  %1313 = vmatpush.bf16.msra.mxu0 %v1030
  %1314 = vmatpush.bf16.msra.mxu0 %v1026
  %1315 = vmatpush.bf16.msra.mxu0 %v1022
  %1316 = vmatpush.bf16.msra.mxu0 %v1018
  %1317 = vmatpush.bf16.msra.mxu0 %v1014
  %1318 = vmatpush.bf16.msra.mxu0 %v1010
  %1319 = vmatmul.bf16.gmra.mxu0 %v385
  %v1320 = vpop.f32.mrf.mxu0
  %v1321 = vadd.f32 %v1308, %v1320
  %v1322 = vpop.f32.mrf.mxu0
  %1323 = vdwg.mxu0
  %1324 = vmatpush.bf16.msra.mxu0 %v943
  %1325 = vmatpush.bf16.msra.mxu0 %v939
  %1326 = vmatpush.bf16.msra.mxu0 %v935
  %1327 = vmatpush.bf16.msra.mxu0 %v931
  %1328 = vmatpush.bf16.msra.mxu0 %v927
  %1329 = vmatpush.bf16.msra.mxu0 %v923
  %1330 = vmatpush.bf16.msra.mxu0 %v919
  %1331 = vmatpush.bf16.msra.mxu0 %v915
  %1332 = vmatmul.bf16.gmra.mxu0 %v382
  %v1333 = vpop.f32.mrf.mxu0
  %v1334 = vadd.f32 %v523, %v1333
  %v1335 = vpop.f32.mrf.mxu0
  %1336 = vdwg.mxu0
  %1337 = vmatpush.bf16.msra.mxu0 %v975
  %1338 = vmatpush.bf16.msra.mxu0 %v971
  %1339 = vmatpush.bf16.msra.mxu0 %v967
  %1340 = vmatpush.bf16.msra.mxu0 %v963
  %1341 = vmatpush.bf16.msra.mxu0 %v959
  %1342 = vmatpush.bf16.msra.mxu0 %v955
  %1343 = vmatpush.bf16.msra.mxu0 %v951
  %1344 = vmatpush.bf16.msra.mxu0 %v947
  %1345 = vmatmul.bf16.gmra.mxu0 %v383
  %v1346 = vpop.f32.mrf.mxu0
  %v1347 = vadd.f32 %v1334, %v1346
  %v1348 = vpop.f32.mrf.mxu0
  %1349 = vdwg.mxu0
  %1350 = vmatpush.bf16.msra.mxu0 %v1007
  %1351 = vmatpush.bf16.msra.mxu0 %v1003
  %1352 = vmatpush.bf16.msra.mxu0 %v999
  %1353 = vmatpush.bf16.msra.mxu0 %v995
  %1354 = vmatpush.bf16.msra.mxu0 %v991
  %1355 = vmatpush.bf16.msra.mxu0 %v987
  %1356 = vmatpush.bf16.msra.mxu0 %v983
  %1357 = vmatpush.bf16.msra.mxu0 %v979
  %1358 = vmatmul.bf16.gmra.mxu0 %v384
  %v1359 = vpop.f32.mrf.mxu0
  %v1360 = vadd.f32 %v1347, %v1359
  %v1361 = vpop.f32.mrf.mxu0
  %1362 = vdwg.mxu0
  %1363 = vmatpush.bf16.msra.mxu0 %v1039
  %1364 = vmatpush.bf16.msra.mxu0 %v1035
  %1365 = vmatpush.bf16.msra.mxu0 %v1031
  %1366 = vmatpush.bf16.msra.mxu0 %v1027
  %1367 = vmatpush.bf16.msra.mxu0 %v1023
  %1368 = vmatpush.bf16.msra.mxu0 %v1019
  %1369 = vmatpush.bf16.msra.mxu0 %v1015
  %1370 = vmatpush.bf16.msra.mxu0 %v1011
  %1371 = vmatmul.bf16.gmra.mxu0 %v385
  %v1372 = vpop.f32.mrf.mxu0
  %v1373 = vadd.f32 %v1360, %v1372
  %v1374 = vpop.f32.mrf.mxu0
  %1375 = vdwg.mxu0
  %v1376 = vmax.f32 %v1217, 0.0
  %v1377 = vmax.f32 %v1269, 0.0
  %v1378 = vmax.f32 %v1321, 0.0
  %v1379 = vmax.f32 %v1373, 0.0
  %v1380 = vld [vmem:[%s7] sm:$0xff]
  %v1381 = vld [vmem:[%s7 + $0x8] sm:$0xff]
  %v1382 = vld [vmem:[%s7 + $0x10] sm:$0xff]
  %v1383 = vld [vmem:[%s7 + $0x18] sm:$0xff]
  %v1384 = vld [vmem:[%s7 + $0x20] sm:$0xff]
  %v1385 = vld [vmem:[%s7 + $0x28] sm:$0xff]
  %v1386 = vld [vmem:[%s7 + $0x30] sm:$0xff]
  %v1387 = vld [vmem:[%s7 + $0x38] sm:$0xff]
  %v1388 = vld [vmem:[%s7 + $0x40] sm:$0xff]
  %v1389 = vld [vmem:[%s7 + $0x48] sm:$0xff]
  %v1390 = vld [vmem:[%s7 + $0x50] sm:$0xff]
  %v1391 = vld [vmem:[%s7 + $0x58] sm:$0xff]
  %v1392 = vld [vmem:[%s7 + $0x60] sm:$0xff]
  %v1393 = vld [vmem:[%s7 + $0x68] sm:$0xff]
  %v1394 = vld [vmem:[%s7 + $0x70] sm:$0xff]
  %v1395 = vld [vmem:[%s7 + $0x78] sm:$0xff]
  %v1396 = vld [vmem:[%s7 + $0x80] sm:$0xff]
  %v1397 = vld [vmem:[%s7 + $0x88] sm:$0xff]
  %v1398 = vld [vmem:[%s7 + $0x90] sm:$0xff]
  %v1399 = vld [vmem:[%s7 + $0x98] sm:$0xff]
  %v1400 = vld [vmem:[%s7 + $0xa0] sm:$0xff]
  %v1401 = vld [vmem:[%s7 + $0xa8] sm:$0xff]
  %v1402 = vld [vmem:[%s7 + $0xb0] sm:$0xff]
  %v1403 = vld [vmem:[%s7 + $0xb8] sm:$0xff]
  %v1404 = vld [vmem:[%s7 + $0xc0] sm:$0xff]
  %v1405 = vld [vmem:[%s7 + $0xc8] sm:$0xff]
  %v1406 = vld [vmem:[%s7 + $0xd0] sm:$0xff]
  %v1407 = vld [vmem:[%s7 + $0xd8] sm:$0xff]
  %v1408 = vld [vmem:[%s7 + $0xe0] sm:$0xff]
  %v1409 = vld [vmem:[%s7 + $0xe8] sm:$0xff]
  %v1410 = vld [vmem:[%s7 + $0xf0] sm:$0xff]
  %v1411 = vld [vmem:[%s7 + $0xf8] sm:$0xff]
  %v1412 = vld [vmem:[%s7 + $0x100] sm:$0xff]
  %v1413 = vld [vmem:[%s7 + $0x108] sm:$0xff]
  %v1414 = vld [vmem:[%s7 + $0x110] sm:$0xff]
  %v1415 = vld [vmem:[%s7 + $0x118] sm:$0xff]
  %v1416 = vld [vmem:[%s7 + $0x120] sm:$0xff]
  %v1417 = vld [vmem:[%s7 + $0x128] sm:$0xff]
  %v1418 = vld [vmem:[%s7 + $0x130] sm:$0xff]
  %v1419 = vld [vmem:[%s7 + $0x138] sm:$0xff]
  %v1420 = vld [vmem:[%s7 + $0x140] sm:$0xff]
  %v1421 = vld [vmem:[%s7 + $0x148] sm:$0xff]
  %v1422 = vld [vmem:[%s7 + $0x150] sm:$0xff]
  %v1423 = vld [vmem:[%s7 + $0x158] sm:$0xff]
  %v1424 = vld [vmem:[%s7 + $0x160] sm:$0xff]
  %v1425 = vld [vmem:[%s7 + $0x168] sm:$0xff]
  %v1426 = vld [vmem:[%s7 + $0x170] sm:$0xff]
  %v1427 = vld [vmem:[%s7 + $0x178] sm:$0xff]
  %v1428 = vld [vmem:[%s7 + $0x180] sm:$0xff]
  %v1429 = vld [vmem:[%s7 + $0x188] sm:$0xff]
  %v1430 = vld [vmem:[%s7 + $0x190] sm:$0xff]
  %v1431 = vld [vmem:[%s7 + $0x198] sm:$0xff]
  %v1432 = vld [vmem:[%s7 + $0x1a0] sm:$0xff]
  %v1433 = vld [vmem:[%s7 + $0x1a8] sm:$0xff]
  %v1434 = vld [vmem:[%s7 + $0x1b0] sm:$0xff]
  %v1435 = vld [vmem:[%s7 + $0x1b8] sm:$0xff]
  %v1436 = vld [vmem:[%s7 + $0x1c0] sm:$0xff]
  %v1437 = vld [vmem:[%s7 + $0x1c8] sm:$0xff]
  %v1438 = vld [vmem:[%s7 + $0x1d0] sm:$0xff]
  %v1439 = vld [vmem:[%s7 + $0x1d8] sm:$0xff]
  %v1440 = vld [vmem:[%s7 + $0x1e0] sm:$0xff]
  %v1441 = vld [vmem:[%s7 + $0x1e8] sm:$0xff]
  %v1442 = vld [vmem:[%s7 + $0x1f0] sm:$0xff]
  %v1443 = vld [vmem:[%s7 + $0x1f8] sm:$0xff]
  %v1444 = vld [vmem:[%s7 + $0x200] sm:$0xff]
  %v1445 = vld [vmem:[%s7 + $0x208] sm:$0xff]
  %v1446 = vld [vmem:[%s7 + $0x210] sm:$0xff]
  %v1447 = vld [vmem:[%s7 + $0x218] sm:$0xff]
  %v1448 = vld [vmem:[%s7 + $0x220] sm:$0xff]
  %v1449 = vld [vmem:[%s7 + $0x228] sm:$0xff]
  %v1450 = vld [vmem:[%s7 + $0x230] sm:$0xff]
  %v1451 = vld [vmem:[%s7 + $0x238] sm:$0xff]
  %v1452 = vld [vmem:[%s7 + $0x240] sm:$0xff]
  %v1453 = vld [vmem:[%s7 + $0x248] sm:$0xff]
  %v1454 = vld [vmem:[%s7 + $0x250] sm:$0xff]
  %v1455 = vld [vmem:[%s7 + $0x258] sm:$0xff]
  %v1456 = vld [vmem:[%s7 + $0x260] sm:$0xff]
  %v1457 = vld [vmem:[%s7 + $0x268] sm:$0xff]
  %v1458 = vld [vmem:[%s7 + $0x270] sm:$0xff]
  %v1459 = vld [vmem:[%s7 + $0x278] sm:$0xff]
  %v1460 = vld [vmem:[%s7 + $0x280] sm:$0xff]
  %v1461 = vld [vmem:[%s7 + $0x288] sm:$0xff]
  %v1462 = vld [vmem:[%s7 + $0x290] sm:$0xff]
  %v1463 = vld [vmem:[%s7 + $0x298] sm:$0xff]
  %v1464 = vld [vmem:[%s7 + $0x2a0] sm:$0xff]
  %v1465 = vld [vmem:[%s7 + $0x2a8] sm:$0xff]
  %v1466 = vld [vmem:[%s7 + $0x2b0] sm:$0xff]
  %v1467 = vld [vmem:[%s7 + $0x2b8] sm:$0xff]
  %v1468 = vld [vmem:[%s7 + $0x2c0] sm:$0xff]
  %v1469 = vld [vmem:[%s7 + $0x2c8] sm:$0xff]
  %v1470 = vld [vmem:[%s7 + $0x2d0] sm:$0xff]
  %v1471 = vld [vmem:[%s7 + $0x2d8] sm:$0xff]
  %v1472 = vld [vmem:[%s7 + $0x2e0] sm:$0xff]
  %v1473 = vld [vmem:[%s7 + $0x2e8] sm:$0xff]
  %v1474 = vld [vmem:[%s7 + $0x2f0] sm:$0xff]
  %v1475 = vld [vmem:[%s7 + $0x2f8] sm:$0xff]
  %v1476 = vld [vmem:[%s7 + $0x300] sm:$0xff]
  %v1477 = vld [vmem:[%s7 + $0x308] sm:$0xff]
  %v1478 = vld [vmem:[%s7 + $0x310] sm:$0xff]
  %v1479 = vld [vmem:[%s7 + $0x318] sm:$0xff]
  %v1480 = vld [vmem:[%s7 + $0x320] sm:$0xff]
  %v1481 = vld [vmem:[%s7 + $0x328] sm:$0xff]
  %v1482 = vld [vmem:[%s7 + $0x330] sm:$0xff]
  %v1483 = vld [vmem:[%s7 + $0x338] sm:$0xff]
  %v1484 = vld [vmem:[%s7 + $0x340] sm:$0xff]
  %v1485 = vld [vmem:[%s7 + $0x348] sm:$0xff]
  %v1486 = vld [vmem:[%s7 + $0x350] sm:$0xff]
  %v1487 = vld [vmem:[%s7 + $0x358] sm:$0xff]
  %v1488 = vld [vmem:[%s7 + $0x360] sm:$0xff]
  %v1489 = vld [vmem:[%s7 + $0x368] sm:$0xff]
  %v1490 = vld [vmem:[%s7 + $0x370] sm:$0xff]
  %v1491 = vld [vmem:[%s7 + $0x378] sm:$0xff]
  %v1492 = vld [vmem:[%s7 + $0x380] sm:$0xff]
  %v1493 = vld [vmem:[%s7 + $0x388] sm:$0xff]
  %v1494 = vld [vmem:[%s7 + $0x390] sm:$0xff]
  %v1495 = vld [vmem:[%s7 + $0x398] sm:$0xff]
  %v1496 = vld [vmem:[%s7 + $0x3a0] sm:$0xff]
  %v1497 = vld [vmem:[%s7 + $0x3a8] sm:$0xff]
  %v1498 = vld [vmem:[%s7 + $0x3b0] sm:$0xff]
  %v1499 = vld [vmem:[%s7 + $0x3b8] sm:$0xff]
  %v1500 = vld [vmem:[%s7 + $0x3c0] sm:$0xff]
  %v1501 = vld [vmem:[%s7 + $0x3c8] sm:$0xff]
  %v1502 = vld [vmem:[%s7 + $0x3d0] sm:$0xff]
  %v1503 = vld [vmem:[%s7 + $0x3d8] sm:$0xff]
  %v1504 = vld [vmem:[%s7 + $0x3e0] sm:$0xff]
  %v1505 = vld [vmem:[%s7 + $0x3e8] sm:$0xff]
  %v1506 = vld [vmem:[%s7 + $0x3f0] sm:$0xff]
  %v1507 = vld [vmem:[%s7 + $0x3f8] sm:$0xff]
  %v1508 = vld [vmem:[%s8] sm:$0xf]
  %v1510 = vperm.slane %v1508, 0
  %v1511 = vperm.slane %v1508, 1
  %v1512 = vperm.slane %v1508, 2
  %v1513 = vperm.slane %v1508, 3
  %v1646 = vunpack.c.l.b16 %v1380
  %v1647 = vunpack.c.h.b16 %v1380
  %v1648 = vunpack.c.l.b16 %v1381
  %v1649 = vunpack.c.h.b16 %v1381
  %v1650 = vunpack.c.l.b16 %v1382
  %v1651 = vunpack.c.h.b16 %v1382
  %v1652 = vunpack.c.l.b16 %v1383
  %v1653 = vunpack.c.h.b16 %v1383
  %v1654 = vunpack.c.l.b16 %v1384
  %v1655 = vunpack.c.h.b16 %v1384
  %v1656 = vunpack.c.l.b16 %v1385
  %v1657 = vunpack.c.h.b16 %v1385
  %v1658 = vunpack.c.l.b16 %v1386
  %v1659 = vunpack.c.h.b16 %v1386
  %v1660 = vunpack.c.l.b16 %v1387
  %v1661 = vunpack.c.h.b16 %v1387
  %v1662 = vunpack.c.l.b16 %v1388
  %v1663 = vunpack.c.h.b16 %v1388
  %v1664 = vunpack.c.l.b16 %v1389
  %v1665 = vunpack.c.h.b16 %v1389
  %v1666 = vunpack.c.l.b16 %v1390
  %v1667 = vunpack.c.h.b16 %v1390
  %v1668 = vunpack.c.l.b16 %v1391
  %v1669 = vunpack.c.h.b16 %v1391
  %v1670 = vunpack.c.l.b16 %v1392
  %v1671 = vunpack.c.h.b16 %v1392
  %v1672 = vunpack.c.l.b16 %v1393
  %v1673 = vunpack.c.h.b16 %v1393
  %v1674 = vunpack.c.l.b16 %v1394
  %v1675 = vunpack.c.h.b16 %v1394
  %v1676 = vunpack.c.l.b16 %v1395
  %v1677 = vunpack.c.h.b16 %v1395
  %v1678 = vunpack.c.l.b16 %v1396
  %v1679 = vunpack.c.h.b16 %v1396
  %v1680 = vunpack.c.l.b16 %v1397
  %v1681 = vunpack.c.h.b16 %v1397
  %v1682 = vunpack.c.l.b16 %v1398
  %v1683 = vunpack.c.h.b16 %v1398
  %v1684 = vunpack.c.l.b16 %v1399
  %v1685 = vunpack.c.h.b16 %v1399
  %v1686 = vunpack.c.l.b16 %v1400
  %v1687 = vunpack.c.h.b16 %v1400
  %v1688 = vunpack.c.l.b16 %v1401
  %v1689 = vunpack.c.h.b16 %v1401
  %v1690 = vunpack.c.l.b16 %v1402
  %v1691 = vunpack.c.h.b16 %v1402
  %v1692 = vunpack.c.l.b16 %v1403
  %v1693 = vunpack.c.h.b16 %v1403
  %v1694 = vunpack.c.l.b16 %v1404
  %v1695 = vunpack.c.h.b16 %v1404
  %v1696 = vunpack.c.l.b16 %v1405
  %v1697 = vunpack.c.h.b16 %v1405
  %v1698 = vunpack.c.l.b16 %v1406
  %v1699 = vunpack.c.h.b16 %v1406
  %v1700 = vunpack.c.l.b16 %v1407
  %v1701 = vunpack.c.h.b16 %v1407
  %v1702 = vunpack.c.l.b16 %v1408
  %v1703 = vunpack.c.h.b16 %v1408
  %v1704 = vunpack.c.l.b16 %v1409
  %v1705 = vunpack.c.h.b16 %v1409
  %v1706 = vunpack.c.l.b16 %v1410
  %v1707 = vunpack.c.h.b16 %v1410
  %v1708 = vunpack.c.l.b16 %v1411
  %v1709 = vunpack.c.h.b16 %v1411
  %v1710 = vunpack.c.l.b16 %v1412
  %v1711 = vunpack.c.h.b16 %v1412
  %v1712 = vunpack.c.l.b16 %v1413
  %v1713 = vunpack.c.h.b16 %v1413
  %v1714 = vunpack.c.l.b16 %v1414
  %v1715 = vunpack.c.h.b16 %v1414
  %v1716 = vunpack.c.l.b16 %v1415
  %v1717 = vunpack.c.h.b16 %v1415
  %v1718 = vunpack.c.l.b16 %v1416
  %v1719 = vunpack.c.h.b16 %v1416
  %v1720 = vunpack.c.l.b16 %v1417
  %v1721 = vunpack.c.h.b16 %v1417
  %v1722 = vunpack.c.l.b16 %v1418
  %v1723 = vunpack.c.h.b16 %v1418
  %v1724 = vunpack.c.l.b16 %v1419
  %v1725 = vunpack.c.h.b16 %v1419
  %v1726 = vunpack.c.l.b16 %v1420
  %v1727 = vunpack.c.h.b16 %v1420
  %v1728 = vunpack.c.l.b16 %v1421
  %v1729 = vunpack.c.h.b16 %v1421
  %v1730 = vunpack.c.l.b16 %v1422
  %v1731 = vunpack.c.h.b16 %v1422
  %v1732 = vunpack.c.l.b16 %v1423
  %v1733 = vunpack.c.h.b16 %v1423
  %v1734 = vunpack.c.l.b16 %v1424
  %v1735 = vunpack.c.h.b16 %v1424
  %v1736 = vunpack.c.l.b16 %v1425
  %v1737 = vunpack.c.h.b16 %v1425
  %v1738 = vunpack.c.l.b16 %v1426
  %v1739 = vunpack.c.h.b16 %v1426
  %v1740 = vunpack.c.l.b16 %v1427
  %v1741 = vunpack.c.h.b16 %v1427
  %v1742 = vunpack.c.l.b16 %v1428
  %v1743 = vunpack.c.h.b16 %v1428
  %v1744 = vunpack.c.l.b16 %v1429
  %v1745 = vunpack.c.h.b16 %v1429
  %v1746 = vunpack.c.l.b16 %v1430
  %v1747 = vunpack.c.h.b16 %v1430
  %v1748 = vunpack.c.l.b16 %v1431
  %v1749 = vunpack.c.h.b16 %v1431
  %v1750 = vunpack.c.l.b16 %v1432
  %v1751 = vunpack.c.h.b16 %v1432
  %v1752 = vunpack.c.l.b16 %v1433
  %v1753 = vunpack.c.h.b16 %v1433
  %v1754 = vunpack.c.l.b16 %v1434
  %v1755 = vunpack.c.h.b16 %v1434
  %v1756 = vunpack.c.l.b16 %v1435
  %v1757 = vunpack.c.h.b16 %v1435
  %v1758 = vunpack.c.l.b16 %v1436
  %v1759 = vunpack.c.h.b16 %v1436
  %v1760 = vunpack.c.l.b16 %v1437
  %v1761 = vunpack.c.h.b16 %v1437
  %v1762 = vunpack.c.l.b16 %v1438
  %v1763 = vunpack.c.h.b16 %v1438
  %v1764 = vunpack.c.l.b16 %v1439
  %v1765 = vunpack.c.h.b16 %v1439
  %v1766 = vunpack.c.l.b16 %v1440
  %v1767 = vunpack.c.h.b16 %v1440
  %v1768 = vunpack.c.l.b16 %v1441
  %v1769 = vunpack.c.h.b16 %v1441
  %v1770 = vunpack.c.l.b16 %v1442
  %v1771 = vunpack.c.h.b16 %v1442
  %v1772 = vunpack.c.l.b16 %v1443
  %v1773 = vunpack.c.h.b16 %v1443
  %v1774 = vunpack.c.l.b16 %v1444
  %v1775 = vunpack.c.h.b16 %v1444
  %v1776 = vunpack.c.l.b16 %v1445
  %v1777 = vunpack.c.h.b16 %v1445
  %v1778 = vunpack.c.l.b16 %v1446
  %v1779 = vunpack.c.h.b16 %v1446
  %v1780 = vunpack.c.l.b16 %v1447
  %v1781 = vunpack.c.h.b16 %v1447
  %v1782 = vunpack.c.l.b16 %v1448
  %v1783 = vunpack.c.h.b16 %v1448
  %v1784 = vunpack.c.l.b16 %v1449
  %v1785 = vunpack.c.h.b16 %v1449
  %v1786 = vunpack.c.l.b16 %v1450
  %v1787 = vunpack.c.h.b16 %v1450
  %v1788 = vunpack.c.l.b16 %v1451
  %v1789 = vunpack.c.h.b16 %v1451
  %v1790 = vunpack.c.l.b16 %v1452
  %v1791 = vunpack.c.h.b16 %v1452
  %v1792 = vunpack.c.l.b16 %v1453
  %v1793 = vunpack.c.h.b16 %v1453
  %v1794 = vunpack.c.l.b16 %v1454
  %v1795 = vunpack.c.h.b16 %v1454
  %v1796 = vunpack.c.l.b16 %v1455
  %v1797 = vunpack.c.h.b16 %v1455
  %v1798 = vunpack.c.l.b16 %v1456
  %v1799 = vunpack.c.h.b16 %v1456
  %v1800 = vunpack.c.l.b16 %v1457
  %v1801 = vunpack.c.h.b16 %v1457
  %v1802 = vunpack.c.l.b16 %v1458
  %v1803 = vunpack.c.h.b16 %v1458
  %v1804 = vunpack.c.l.b16 %v1459
  %v1805 = vunpack.c.h.b16 %v1459
  %v1806 = vunpack.c.l.b16 %v1460
  %v1807 = vunpack.c.h.b16 %v1460
  %v1808 = vunpack.c.l.b16 %v1461
  %v1809 = vunpack.c.h.b16 %v1461
  %v1810 = vunpack.c.l.b16 %v1462
  %v1811 = vunpack.c.h.b16 %v1462
  %v1812 = vunpack.c.l.b16 %v1463
  %v1813 = vunpack.c.h.b16 %v1463
  %v1814 = vunpack.c.l.b16 %v1464
  %v1815 = vunpack.c.h.b16 %v1464
  %v1816 = vunpack.c.l.b16 %v1465
  %v1817 = vunpack.c.h.b16 %v1465
  %v1818 = vunpack.c.l.b16 %v1466
  %v1819 = vunpack.c.h.b16 %v1466
  %v1820 = vunpack.c.l.b16 %v1467
  %v1821 = vunpack.c.h.b16 %v1467
  %v1822 = vunpack.c.l.b16 %v1468
  %v1823 = vunpack.c.h.b16 %v1468
  %v1824 = vunpack.c.l.b16 %v1469
  %v1825 = vunpack.c.h.b16 %v1469
  %v1826 = vunpack.c.l.b16 %v1470
  %v1827 = vunpack.c.h.b16 %v1470
  %v1828 = vunpack.c.l.b16 %v1471
  %v1829 = vunpack.c.h.b16 %v1471
  %v1830 = vunpack.c.l.b16 %v1472
  %v1831 = vunpack.c.h.b16 %v1472
  %v1832 = vunpack.c.l.b16 %v1473
  %v1833 = vunpack.c.h.b16 %v1473
  %v1834 = vunpack.c.l.b16 %v1474
  %v1835 = vunpack.c.h.b16 %v1474
  %v1836 = vunpack.c.l.b16 %v1475
  %v1837 = vunpack.c.h.b16 %v1475
  %v1838 = vunpack.c.l.b16 %v1476
  %v1839 = vunpack.c.h.b16 %v1476
  %v1840 = vunpack.c.l.b16 %v1477
  %v1841 = vunpack.c.h.b16 %v1477
  %v1842 = vunpack.c.l.b16 %v1478
  %v1843 = vunpack.c.h.b16 %v1478
  %v1844 = vunpack.c.l.b16 %v1479
  %v1845 = vunpack.c.h.b16 %v1479
  %v1846 = vunpack.c.l.b16 %v1480
  %v1847 = vunpack.c.h.b16 %v1480
  %v1848 = vunpack.c.l.b16 %v1481
  %v1849 = vunpack.c.h.b16 %v1481
  %v1850 = vunpack.c.l.b16 %v1482
  %v1851 = vunpack.c.h.b16 %v1482
  %v1852 = vunpack.c.l.b16 %v1483
  %v1853 = vunpack.c.h.b16 %v1483
  %v1854 = vunpack.c.l.b16 %v1484
  %v1855 = vunpack.c.h.b16 %v1484
  %v1856 = vunpack.c.l.b16 %v1485
  %v1857 = vunpack.c.h.b16 %v1485
  %v1858 = vunpack.c.l.b16 %v1486
  %v1859 = vunpack.c.h.b16 %v1486
  %v1860 = vunpack.c.l.b16 %v1487
  %v1861 = vunpack.c.h.b16 %v1487
  %v1862 = vunpack.c.l.b16 %v1488
  %v1863 = vunpack.c.h.b16 %v1488
  %v1864 = vunpack.c.l.b16 %v1489
  %v1865 = vunpack.c.h.b16 %v1489
  %v1866 = vunpack.c.l.b16 %v1490
  %v1867 = vunpack.c.h.b16 %v1490
  %v1868 = vunpack.c.l.b16 %v1491
  %v1869 = vunpack.c.h.b16 %v1491
  %v1870 = vunpack.c.l.b16 %v1492
  %v1871 = vunpack.c.h.b16 %v1492
  %v1872 = vunpack.c.l.b16 %v1493
  %v1873 = vunpack.c.h.b16 %v1493
  %v1874 = vunpack.c.l.b16 %v1494
  %v1875 = vunpack.c.h.b16 %v1494
  %v1876 = vunpack.c.l.b16 %v1495
  %v1877 = vunpack.c.h.b16 %v1495
  %v1878 = vunpack.c.l.b16 %v1496
  %v1879 = vunpack.c.h.b16 %v1496
  %v1880 = vunpack.c.l.b16 %v1497
  %v1881 = vunpack.c.h.b16 %v1497
  %v1882 = vunpack.c.l.b16 %v1498
  %v1883 = vunpack.c.h.b16 %v1498
  %v1884 = vunpack.c.l.b16 %v1499
  %v1885 = vunpack.c.h.b16 %v1499
  %v1886 = vunpack.c.l.b16 %v1500
  %v1887 = vunpack.c.h.b16 %v1500
  %v1888 = vunpack.c.l.b16 %v1501
  %v1889 = vunpack.c.h.b16 %v1501
  %v1890 = vunpack.c.l.b16 %v1502
  %v1891 = vunpack.c.h.b16 %v1502
  %v1892 = vunpack.c.l.b16 %v1503
  %v1893 = vunpack.c.h.b16 %v1503
  %v1894 = vunpack.c.l.b16 %v1504
  %v1895 = vunpack.c.h.b16 %v1504
  %v1896 = vunpack.c.l.b16 %v1505
  %v1897 = vunpack.c.h.b16 %v1505
  %v1898 = vunpack.c.l.b16 %v1506
  %v1899 = vunpack.c.h.b16 %v1506
  %v1900 = vunpack.c.l.b16 %v1507
  %v1901 = vunpack.c.h.b16 %v1507
  %v1902 = vpack.c.b16 %v1650, %v1646
  %v1903 = vpack.c.b16 %v1651, %v1647
  %v1904 = vpack.c.b16 %v1652, %v1648
  %v1905 = vpack.c.b16 %v1653, %v1649
  %v1906 = vpack.c.b16 %v1658, %v1654
  %v1907 = vpack.c.b16 %v1659, %v1655
  %v1908 = vpack.c.b16 %v1660, %v1656
  %v1909 = vpack.c.b16 %v1661, %v1657
  %v1910 = vpack.c.b16 %v1666, %v1662
  %v1911 = vpack.c.b16 %v1667, %v1663
  %v1912 = vpack.c.b16 %v1668, %v1664
  %v1913 = vpack.c.b16 %v1669, %v1665
  %v1914 = vpack.c.b16 %v1674, %v1670
  %v1915 = vpack.c.b16 %v1675, %v1671
  %v1916 = vpack.c.b16 %v1676, %v1672
  %v1917 = vpack.c.b16 %v1677, %v1673
  %v1918 = vpack.c.b16 %v1682, %v1678
  %v1919 = vpack.c.b16 %v1683, %v1679
  %v1920 = vpack.c.b16 %v1684, %v1680
  %v1921 = vpack.c.b16 %v1685, %v1681
  %v1922 = vpack.c.b16 %v1690, %v1686
  %v1923 = vpack.c.b16 %v1691, %v1687
  %v1924 = vpack.c.b16 %v1692, %v1688
  %v1925 = vpack.c.b16 %v1693, %v1689
  %v1926 = vpack.c.b16 %v1698, %v1694
  %v1927 = vpack.c.b16 %v1699, %v1695
  %v1928 = vpack.c.b16 %v1700, %v1696
  %v1929 = vpack.c.b16 %v1701, %v1697
  %v1930 = vpack.c.b16 %v1706, %v1702
  %v1931 = vpack.c.b16 %v1707, %v1703
  %v1932 = vpack.c.b16 %v1708, %v1704
  %v1933 = vpack.c.b16 %v1709, %v1705
  %v1934 = vpack.c.b16 %v1714, %v1710
  %v1935 = vpack.c.b16 %v1715, %v1711
  %v1936 = vpack.c.b16 %v1716, %v1712
  %v1937 = vpack.c.b16 %v1717, %v1713
  %v1938 = vpack.c.b16 %v1722, %v1718
  %v1939 = vpack.c.b16 %v1723, %v1719
  %v1940 = vpack.c.b16 %v1724, %v1720
  %v1941 = vpack.c.b16 %v1725, %v1721
  %v1942 = vpack.c.b16 %v1730, %v1726
  %v1943 = vpack.c.b16 %v1731, %v1727
  %v1944 = vpack.c.b16 %v1732, %v1728
  %v1945 = vpack.c.b16 %v1733, %v1729
  %v1946 = vpack.c.b16 %v1738, %v1734
  %v1947 = vpack.c.b16 %v1739, %v1735
  %v1948 = vpack.c.b16 %v1740, %v1736
  %v1949 = vpack.c.b16 %v1741, %v1737
  %v1950 = vpack.c.b16 %v1746, %v1742
  %v1951 = vpack.c.b16 %v1747, %v1743
  %v1952 = vpack.c.b16 %v1748, %v1744
  %v1953 = vpack.c.b16 %v1749, %v1745
  %v1954 = vpack.c.b16 %v1754, %v1750
  %v1955 = vpack.c.b16 %v1755, %v1751
  %v1956 = vpack.c.b16 %v1756, %v1752
  %v1957 = vpack.c.b16 %v1757, %v1753
  %v1958 = vpack.c.b16 %v1762, %v1758
  %v1959 = vpack.c.b16 %v1763, %v1759
  %v1960 = vpack.c.b16 %v1764, %v1760
  %v1961 = vpack.c.b16 %v1765, %v1761
  %v1962 = vpack.c.b16 %v1770, %v1766
  %v1963 = vpack.c.b16 %v1771, %v1767
  %v1964 = vpack.c.b16 %v1772, %v1768
  %v1965 = vpack.c.b16 %v1773, %v1769
  %v1966 = vpack.c.b16 %v1778, %v1774
  %v1967 = vpack.c.b16 %v1779, %v1775
  %v1968 = vpack.c.b16 %v1780, %v1776
  %v1969 = vpack.c.b16 %v1781, %v1777
  %v1970 = vpack.c.b16 %v1786, %v1782
  %v1971 = vpack.c.b16 %v1787, %v1783
  %v1972 = vpack.c.b16 %v1788, %v1784
  %v1973 = vpack.c.b16 %v1789, %v1785
  %v1974 = vpack.c.b16 %v1794, %v1790
  %v1975 = vpack.c.b16 %v1795, %v1791
  %v1976 = vpack.c.b16 %v1796, %v1792
  %v1977 = vpack.c.b16 %v1797, %v1793
  %v1978 = vpack.c.b16 %v1802, %v1798
  %v1979 = vpack.c.b16 %v1803, %v1799
  %v1980 = vpack.c.b16 %v1804, %v1800
  %v1981 = vpack.c.b16 %v1805, %v1801
  %v1982 = vpack.c.b16 %v1810, %v1806
  %v1983 = vpack.c.b16 %v1811, %v1807
  %v1984 = vpack.c.b16 %v1812, %v1808
  %v1985 = vpack.c.b16 %v1813, %v1809
  %v1986 = vpack.c.b16 %v1818, %v1814
  %v1987 = vpack.c.b16 %v1819, %v1815
  %v1988 = vpack.c.b16 %v1820, %v1816
  %v1989 = vpack.c.b16 %v1821, %v1817
  %v1990 = vpack.c.b16 %v1826, %v1822
  %v1991 = vpack.c.b16 %v1827, %v1823
  %v1992 = vpack.c.b16 %v1828, %v1824
  %v1993 = vpack.c.b16 %v1829, %v1825
  %v1994 = vpack.c.b16 %v1834, %v1830
  %v1995 = vpack.c.b16 %v1835, %v1831
  %v1996 = vpack.c.b16 %v1836, %v1832
  %v1997 = vpack.c.b16 %v1837, %v1833
  %v1998 = vpack.c.b16 %v1842, %v1838
  %v1999 = vpack.c.b16 %v1843, %v1839
  %v2000 = vpack.c.b16 %v1844, %v1840
  %v2001 = vpack.c.b16 %v1845, %v1841
  %v2002 = vpack.c.b16 %v1850, %v1846
  %v2003 = vpack.c.b16 %v1851, %v1847
  %v2004 = vpack.c.b16 %v1852, %v1848
  %v2005 = vpack.c.b16 %v1853, %v1849
  %v2006 = vpack.c.b16 %v1858, %v1854
  %v2007 = vpack.c.b16 %v1859, %v1855
  %v2008 = vpack.c.b16 %v1860, %v1856
  %v2009 = vpack.c.b16 %v1861, %v1857
  %v2010 = vpack.c.b16 %v1866, %v1862
  %v2011 = vpack.c.b16 %v1867, %v1863
  %v2012 = vpack.c.b16 %v1868, %v1864
  %v2013 = vpack.c.b16 %v1869, %v1865
  %v2014 = vpack.c.b16 %v1874, %v1870
  %v2015 = vpack.c.b16 %v1875, %v1871
  %v2016 = vpack.c.b16 %v1876, %v1872
  %v2017 = vpack.c.b16 %v1877, %v1873
  %v2018 = vpack.c.b16 %v1882, %v1878
  %v2019 = vpack.c.b16 %v1883, %v1879
  %v2020 = vpack.c.b16 %v1884, %v1880
  %v2021 = vpack.c.b16 %v1885, %v1881
  %v2022 = vpack.c.b16 %v1890, %v1886
  %v2023 = vpack.c.b16 %v1891, %v1887
  %v2024 = vpack.c.b16 %v1892, %v1888
  %v2025 = vpack.c.b16 %v1893, %v1889
  %v2026 = vpack.c.b16 %v1898, %v1894
  %v2027 = vpack.c.b16 %v1899, %v1895
  %v2028 = vpack.c.b16 %v1900, %v1896
  %v2029 = vpack.c.b16 %v1901, %v1897
  %2158 = vmatpush.bf16.msra.mxu0 %v1930
  %2159 = vmatpush.bf16.msra.mxu0 %v1926
  %2160 = vmatpush.bf16.msra.mxu0 %v1922
  %2161 = vmatpush.bf16.msra.mxu0 %v1918
  %2162 = vmatpush.bf16.msra.mxu0 %v1914
  %2163 = vmatpush.bf16.msra.mxu0 %v1910
  %2164 = vmatpush.bf16.msra.mxu0 %v1906
  %2165 = vmatpush.bf16.msra.mxu0 %v1902
  %2166 = vmatmul.bf16.gmra.mxu0 %v386
  %v2167 = vpop.f32.mrf.mxu0
  %v2168 = vadd.f32 %v1510, %v2167
  %v2169 = vpop.f32.mrf.mxu0
  %2170 = vdwg.mxu0
  %2171 = vmatpush.bf16.msra.mxu0 %v1962
  %2172 = vmatpush.bf16.msra.mxu0 %v1958
  %2173 = vmatpush.bf16.msra.mxu0 %v1954
  %2174 = vmatpush.bf16.msra.mxu0 %v1950
  %2175 = vmatpush.bf16.msra.mxu0 %v1946
  %2176 = vmatpush.bf16.msra.mxu0 %v1942
  %2177 = vmatpush.bf16.msra.mxu0 %v1938
  %2178 = vmatpush.bf16.msra.mxu0 %v1934
  %2179 = vmatmul.bf16.gmra.mxu0 %v387
  %v2180 = vpop.f32.mrf.mxu0
  %v2181 = vadd.f32 %v2168, %v2180
  %v2182 = vpop.f32.mrf.mxu0
  %2183 = vdwg.mxu0
  %2184 = vmatpush.bf16.msra.mxu0 %v1994
  %2185 = vmatpush.bf16.msra.mxu0 %v1990
  %2186 = vmatpush.bf16.msra.mxu0 %v1986
  %2187 = vmatpush.bf16.msra.mxu0 %v1982
  %2188 = vmatpush.bf16.msra.mxu0 %v1978
  %2189 = vmatpush.bf16.msra.mxu0 %v1974
  %2190 = vmatpush.bf16.msra.mxu0 %v1970
  %2191 = vmatpush.bf16.msra.mxu0 %v1966
  %2192 = vmatmul.bf16.gmra.mxu0 %v388
  %v2193 = vpop.f32.mrf.mxu0
  %v2194 = vadd.f32 %v2181, %v2193
  %v2195 = vpop.f32.mrf.mxu0
  %2196 = vdwg.mxu0
  %2197 = vmatpush.bf16.msra.mxu0 %v2026
  %2198 = vmatpush.bf16.msra.mxu0 %v2022
  %2199 = vmatpush.bf16.msra.mxu0 %v2018
  %2200 = vmatpush.bf16.msra.mxu0 %v2014
  %2201 = vmatpush.bf16.msra.mxu0 %v2010
  %2202 = vmatpush.bf16.msra.mxu0 %v2006
  %2203 = vmatpush.bf16.msra.mxu0 %v2002
  %2204 = vmatpush.bf16.msra.mxu0 %v1998
  %2205 = vmatmul.bf16.gmra.mxu0 %v389
  %v2206 = vpop.f32.mrf.mxu0
  %v2207 = vadd.f32 %v2194, %v2206
  %v2208 = vpop.f32.mrf.mxu0
  %2209 = vdwg.mxu0
  %2210 = vmatpush.bf16.msra.mxu0 %v1931
  %2211 = vmatpush.bf16.msra.mxu0 %v1927
  %2212 = vmatpush.bf16.msra.mxu0 %v1923
  %2213 = vmatpush.bf16.msra.mxu0 %v1919
  %2214 = vmatpush.bf16.msra.mxu0 %v1915
  %2215 = vmatpush.bf16.msra.mxu0 %v1911
  %2216 = vmatpush.bf16.msra.mxu0 %v1907
  %2217 = vmatpush.bf16.msra.mxu0 %v1903
  %2218 = vmatmul.bf16.gmra.mxu0 %v386
  %v2219 = vpop.f32.mrf.mxu0
  %v2220 = vadd.f32 %v1511, %v2219
  %v2221 = vpop.f32.mrf.mxu0
  %2222 = vdwg.mxu0
  %2223 = vmatpush.bf16.msra.mxu0 %v1963
  %2224 = vmatpush.bf16.msra.mxu0 %v1959
  %2225 = vmatpush.bf16.msra.mxu0 %v1955
  %2226 = vmatpush.bf16.msra.mxu0 %v1951
  %2227 = vmatpush.bf16.msra.mxu0 %v1947
  %2228 = vmatpush.bf16.msra.mxu0 %v1943
  %2229 = vmatpush.bf16.msra.mxu0 %v1939
  %2230 = vmatpush.bf16.msra.mxu0 %v1935
  %2231 = vmatmul.bf16.gmra.mxu0 %v387
  %v2232 = vpop.f32.mrf.mxu0
  %v2233 = vadd.f32 %v2220, %v2232
  %v2234 = vpop.f32.mrf.mxu0
  %2235 = vdwg.mxu0
  %2236 = vmatpush.bf16.msra.mxu0 %v1995
  %2237 = vmatpush.bf16.msra.mxu0 %v1991
  %2238 = vmatpush.bf16.msra.mxu0 %v1987
  %2239 = vmatpush.bf16.msra.mxu0 %v1983
  %2240 = vmatpush.bf16.msra.mxu0 %v1979
  %2241 = vmatpush.bf16.msra.mxu0 %v1975
  %2242 = vmatpush.bf16.msra.mxu0 %v1971
  %2243 = vmatpush.bf16.msra.mxu0 %v1967
  %2244 = vmatmul.bf16.gmra.mxu0 %v388
  %v2245 = vpop.f32.mrf.mxu0
  %v2246 = vadd.f32 %v2233, %v2245
  %v2247 = vpop.f32.mrf.mxu0
  %2248 = vdwg.mxu0
  %2249 = vmatpush.bf16.msra.mxu0 %v2027
  %2250 = vmatpush.bf16.msra.mxu0 %v2023
  %2251 = vmatpush.bf16.msra.mxu0 %v2019
  %2252 = vmatpush.bf16.msra.mxu0 %v2015
  %2253 = vmatpush.bf16.msra.mxu0 %v2011
  %2254 = vmatpush.bf16.msra.mxu0 %v2007
  %2255 = vmatpush.bf16.msra.mxu0 %v2003
  %2256 = vmatpush.bf16.msra.mxu0 %v1999
  %2257 = vmatmul.bf16.gmra.mxu0 %v389
  %v2258 = vpop.f32.mrf.mxu0
  %v2259 = vadd.f32 %v2246, %v2258
  %v2260 = vpop.f32.mrf.mxu0
  %2261 = vdwg.mxu0
  %2262 = vmatpush.bf16.msra.mxu0 %v1932
  %2263 = vmatpush.bf16.msra.mxu0 %v1928
  %2264 = vmatpush.bf16.msra.mxu0 %v1924
  %2265 = vmatpush.bf16.msra.mxu0 %v1920
  %2266 = vmatpush.bf16.msra.mxu0 %v1916
  %2267 = vmatpush.bf16.msra.mxu0 %v1912
  %2268 = vmatpush.bf16.msra.mxu0 %v1908
  %2269 = vmatpush.bf16.msra.mxu0 %v1904
  %2270 = vmatmul.bf16.gmra.mxu0 %v386
  %v2271 = vpop.f32.mrf.mxu0
  %v2272 = vadd.f32 %v1512, %v2271
  %v2273 = vpop.f32.mrf.mxu0
  %2274 = vdwg.mxu0
  %2275 = vmatpush.bf16.msra.mxu0 %v1964
  %2276 = vmatpush.bf16.msra.mxu0 %v1960
  %2277 = vmatpush.bf16.msra.mxu0 %v1956
  %2278 = vmatpush.bf16.msra.mxu0 %v1952
  %2279 = vmatpush.bf16.msra.mxu0 %v1948
  %2280 = vmatpush.bf16.msra.mxu0 %v1944
  %2281 = vmatpush.bf16.msra.mxu0 %v1940
  %2282 = vmatpush.bf16.msra.mxu0 %v1936
  %2283 = vmatmul.bf16.gmra.mxu0 %v387
  %v2284 = vpop.f32.mrf.mxu0
  %v2285 = vadd.f32 %v2272, %v2284
  %v2286 = vpop.f32.mrf.mxu0
  %2287 = vdwg.mxu0
  %2288 = vmatpush.bf16.msra.mxu0 %v1996
  %2289 = vmatpush.bf16.msra.mxu0 %v1992
  %2290 = vmatpush.bf16.msra.mxu0 %v1988
  %2291 = vmatpush.bf16.msra.mxu0 %v1984
  %2292 = vmatpush.bf16.msra.mxu0 %v1980
  %2293 = vmatpush.bf16.msra.mxu0 %v1976
  %2294 = vmatpush.bf16.msra.mxu0 %v1972
  %2295 = vmatpush.bf16.msra.mxu0 %v1968
  %2296 = vmatmul.bf16.gmra.mxu0 %v388
  %v2297 = vpop.f32.mrf.mxu0
  %v2298 = vadd.f32 %v2285, %v2297
  %v2299 = vpop.f32.mrf.mxu0
  %2300 = vdwg.mxu0
  %2301 = vmatpush.bf16.msra.mxu0 %v2028
  %2302 = vmatpush.bf16.msra.mxu0 %v2024
  %2303 = vmatpush.bf16.msra.mxu0 %v2020
  %2304 = vmatpush.bf16.msra.mxu0 %v2016
  %2305 = vmatpush.bf16.msra.mxu0 %v2012
  %2306 = vmatpush.bf16.msra.mxu0 %v2008
  %2307 = vmatpush.bf16.msra.mxu0 %v2004
  %2308 = vmatpush.bf16.msra.mxu0 %v2000
  %2309 = vmatmul.bf16.gmra.mxu0 %v389
  %v2310 = vpop.f32.mrf.mxu0
  %v2311 = vadd.f32 %v2298, %v2310
  %v2312 = vpop.f32.mrf.mxu0
  %2313 = vdwg.mxu0
  %2314 = vmatpush.bf16.msra.mxu0 %v1933
  %2315 = vmatpush.bf16.msra.mxu0 %v1929
  %2316 = vmatpush.bf16.msra.mxu0 %v1925
  %2317 = vmatpush.bf16.msra.mxu0 %v1921
  %2318 = vmatpush.bf16.msra.mxu0 %v1917
  %2319 = vmatpush.bf16.msra.mxu0 %v1913
  %2320 = vmatpush.bf16.msra.mxu0 %v1909
  %2321 = vmatpush.bf16.msra.mxu0 %v1905
  %2322 = vmatmul.bf16.gmra.mxu0 %v386
  %v2323 = vpop.f32.mrf.mxu0
  %v2324 = vadd.f32 %v1513, %v2323
  %v2325 = vpop.f32.mrf.mxu0
  %2326 = vdwg.mxu0
  %2327 = vmatpush.bf16.msra.mxu0 %v1965
  %2328 = vmatpush.bf16.msra.mxu0 %v1961
  %2329 = vmatpush.bf16.msra.mxu0 %v1957
  %2330 = vmatpush.bf16.msra.mxu0 %v1953
  %2331 = vmatpush.bf16.msra.mxu0 %v1949
  %2332 = vmatpush.bf16.msra.mxu0 %v1945
  %2333 = vmatpush.bf16.msra.mxu0 %v1941
  %2334 = vmatpush.bf16.msra.mxu0 %v1937
  %2335 = vmatmul.bf16.gmra.mxu0 %v387
  %v2336 = vpop.f32.mrf.mxu0
  %v2337 = vadd.f32 %v2324, %v2336
  %v2338 = vpop.f32.mrf.mxu0
  %2339 = vdwg.mxu0
  %2340 = vmatpush.bf16.msra.mxu0 %v1997
  %2341 = vmatpush.bf16.msra.mxu0 %v1993
  %2342 = vmatpush.bf16.msra.mxu0 %v1989
  %2343 = vmatpush.bf16.msra.mxu0 %v1985
  %2344 = vmatpush.bf16.msra.mxu0 %v1981
  %2345 = vmatpush.bf16.msra.mxu0 %v1977
  %2346 = vmatpush.bf16.msra.mxu0 %v1973
  %2347 = vmatpush.bf16.msra.mxu0 %v1969
  %2348 = vmatmul.bf16.gmra.mxu0 %v388
  %v2349 = vpop.f32.mrf.mxu0
  %v2350 = vadd.f32 %v2337, %v2349
  %v2351 = vpop.f32.mrf.mxu0
  %2352 = vdwg.mxu0
  %2353 = vmatpush.bf16.msra.mxu0 %v2029
  %2354 = vmatpush.bf16.msra.mxu0 %v2025
  %2355 = vmatpush.bf16.msra.mxu0 %v2021
  %2356 = vmatpush.bf16.msra.mxu0 %v2017
  %2357 = vmatpush.bf16.msra.mxu0 %v2013
  %2358 = vmatpush.bf16.msra.mxu0 %v2009
  %2359 = vmatpush.bf16.msra.mxu0 %v2005
  %2360 = vmatpush.bf16.msra.mxu0 %v2001
  %2361 = vmatmul.bf16.gmra.mxu0 %v389
  %v2362 = vpop.f32.mrf.mxu0
  %v2363 = vadd.f32 %v2350, %v2362
  %v2364 = vpop.f32.mrf.mxu0
  %2365 = vdwg.mxu0
  %v2366 = vmax.f32 %v2207, 0.0
  %v2367 = vmax.f32 %v2259, 0.0
  %v2368 = vmax.f32 %v2311, 0.0
  %v2369 = vmax.f32 %v2363, 0.0
  %v2370 = vld [vmem:[%s9] sm:$0xf]
  %v2371 = vunpack.c.l.bf16 %v2370
  %v2373 = vperm.slane %v2371, 0
  %v2374 = vperm.slane %v2371, 2
  %v2375 = vperm.slane %v2371, 4
  %v2376 = vperm.slane %v2371, 6
  %v2381 = vperm.slane %v2373, 0
  %v2382 = vperm.slane %v2374, 0
  %v2383 = vperm.slane %v2375, 0
  %v2384 = vperm.slane %v2376, 0
  %v2385 = vmul.f32 %v1376, %v2381
  %v2386 = vmul.f32 %v1377, %v2382
  %v2387 = vmul.f32 %v1378, %v2383
  %v2388 = vmul.f32 %v1379, %v2384
  %v2389 = vadd.f32 %v2385, %v2386
  %v2390 = vadd.f32 %v2389, %v2387
  %v2391 = vadd.f32 %v2390, %v2388
  %2392 = vadd.xlane.f32.xlu0 %v2391
  %v2393 = vpop.xlane.xlu0 %2392
  %v2394 = vld [vmem:[#allocation2] sm:$0x1]
  %v2396 = vperm.slane %v2394, 0
  %v2398 = vadd.f32 %v2393, %v2396
  %v2399 = vld [vmem:[%s11] sm:$0xf]
  %v2400 = vunpack.c.l.bf16 %v2399
  %v2402 = vperm.slane %v2400, 0
  %v2403 = vperm.slane %v2400, 2
  %v2404 = vperm.slane %v2400, 4
  %v2405 = vperm.slane %v2400, 6
  %v2410 = vperm.slane %v2402, 0
  %v2411 = vperm.slane %v2403, 0
  %v2412 = vperm.slane %v2404, 0
  %v2413 = vperm.slane %v2405, 0
  %v2414 = vmul.f32 %v2366, %v2410
  %v2415 = vmul.f32 %v2367, %v2411
  %v2416 = vmul.f32 %v2368, %v2412
  %v2417 = vmul.f32 %v2369, %v2413
  %v2418 = vadd.f32 %v2414, %v2415
  %v2419 = vadd.f32 %v2418, %v2416
  %v2420 = vadd.f32 %v2419, %v2417
  %2421 = vadd.xlane.f32.xlu0 %v2420
  %v2422 = vpop.xlane.xlu0 %2421
  %v2423 = vld [vmem:[#allocation3] sm:$0x1]
  %v2425 = vperm.slane %v2423, 0
  %v2427 = vadd.f32 %v2422, %v2425
  %2429 = vrot.lane.b32.xlu0 %v2427, 1
  %v2430 = vpop.permute.xlu0 %2429
  %vm2432 = vcmask 7168
  %v2433 = vsel %vm2432, %v2398, %v2430
  %vm2434 = vcmask 15360
  %2435 = vst.msk [vmem:[%s13] sm:$0xff] %vm2434, %v2433
  // Predicated region
  $region54: #{soft_q_forward.1} parent=0 // pred_check
    _
  $region55: #{soft_q_forward.1} parent=0 // pred_check_branch
    %2437 = sbr.rel (0) target = $region57
  $region56: #{soft_q_forward.1} parent=0 // pred_region
    _
  $region57: #{soft_q_forward.1} parent=0 // pred_fallthru
    _
  // Predicated region
  $region58: #{soft_q_forward.1} parent=0 // pred_check
    _
  $region59: #{soft_q_forward.1} parent=0 // pred_check_branch
    %2439 = sbr.rel (0) target = $region61
  $region60: #{soft_q_forward.1} parent=0 // pred_region
    _
  $region61: #{soft_q_forward.1} parent=0 // pred_fallthru
    _

</llo_original>
